<compile_context>
chip_gen: v5e
topology: v5e:2x2
jax: 0.10.0
libtpu: 0.0.40
codegen_flags: <defaults>
</compile_context>

<pallas_src>
import numpy as np
import jax
import jax.numpy as jnp
from jax import lax
from jax.experimental import pallas as pl
from jax.experimental.pallas import tpu as pltpu


# ----------------------------------------------------------------------------
# Fused Pallas kernel (bi-LSTM stack + decoder) -- one batch tile per grid step
# ----------------------------------------------------------------------------
def _make_fused_kernel(num_layers, T, B, H):
    H2, H4, H6, H8 = 2 * H, 4 * H, 6 * H, 8 * H

    def kernel(*refs):
        # ---- unpack refs: inputs..., out_ref, scratch... -------------------
        x_ref, z_ref = refs[0], refs[1]
        idx = 2
        layers = []
        for _ in range(num_layers):
            layers.append(refs[idx:idx + 3])           # wih_cat, whh_blk, b_cat
            idx += 3
        w1h_ref, w1z_ref, b1_ref, w2_ref, b2_ref = refs[idx:idx + 5]
        idx += 5
        out_ref = refs[idx]
        seq_ref, p_ref = refs[idx + 1], refs[idx + 2]  # VMEM scratch

        # Gate layout (8H lanes, gate-major / direction-minor):
        #   [ i_f | i_b | f_f | f_b | o_f | o_b | g_f | g_b ]   (each block H lanes)
        # Sigmoid gates (i,f,o) are computed as 0.5*tanh(x/2)+0.5; the 0.5 input
        # scale is pre-folded into the weights so ONE tanh covers all 8H lanes.
        lane = lax.broadcasted_iota(jnp.int32, (B, H8), 1)
        sig_mask = lane < H6                  # i/f/o gate groups
        fwd_mask = (lane % H2) < H            # forward-direction half of each group

        h2 = None
        for layer in range(num_layers):
            wih_ref, whh_ref, b_ref = layers[layer]
            inp = x_ref[...] if layer == 0 else seq_ref[...]
            # Hoisted input->gates projection for BOTH directions (no recurrence
            # dependency): (T*B, Din) @ (Din, 8H) + (1, 8H).
            # TODO(synk): chunk this over a time block if T*B*8H outgrows VMEM.
            p_ref[...] = (jnp.dot(inp, wih_ref[...],
                                  preferred_element_type=jnp.float32) + b_ref[...])

            whh = whh_ref[...]                          # (2H, 8H), loaded once
            h2 = jnp.zeros((B, H2), jnp.float32)        # [h_f | h_b]
            c2 = jnp.zeros((B, H2), jnp.float32)        # [c_f | c_b]
            last_layer = layer == num_layers - 1

            # Statically unrolled: T is small here.
            # TODO(synk): switch to lax.fori_loop(..., unroll=2..4) for T >~ 32.
            for t in range(T):
                rt = T - 1 - t
                # Forward direction consumes time t, backward consumes time T-1-t.
                p_t = p_ref[t * B:(t + 1) * B, :]
                p_rt = p_ref[rt * B:(rt + 1) * B, :]
                p_comb = jnp.where(fwd_mask, p_t, p_rt)         # off the h->h chain
                gates = p_comb + jnp.dot(h2, whh,
                                         preferred_element_type=jnp.float32)
                tg = jnp.tanh(gates)                             # single EUP pass
                act = jnp.where(sig_mask, 0.5 * tg + 0.5, tg)
                i_g = act[:, 0:H2]
                f_g = act[:, H2:H4]
                o_g = act[:, H4:H6]
                g_g = act[:, H6:H8]
                c2 = f_g * c2 + i_g * g_g
                h2 = o_g * jnp.tanh(c2)
                if not last_layer:
                    # Next layer's input sequence stays in VMEM, lane-aligned halves.
                    seq_ref[t * B:(t + 1) * B, 0:H] = h2[:, 0:H]
                    seq_ref[rt * B:(rt + 1) * B, H:H2] = h2[:, H:H2]

        # ---- decoder: Linear -> ReLU -> BN(eval, folded into w2/b2) ->
        #               Dropout(identity) -> Linear ----------------------------
        # ctx = [h_f | h_b | z]; the concat is folded into split matmuls.
        # TODO(synk): training-mode Dropout / batch-statistic BatchNorm not implemented.
        hid = (jnp.dot(h2, w1h_ref[...], preferred_element_type=jnp.float32)
               + jnp.dot(z_ref[...], w1z_ref[...], preferred_element_type=jnp.float32)
               + b1_ref[...])
        hid = jnp.maximum(hid, 0.0)
        out_ref[...] = (jnp.dot(hid, w2_ref[...], preferred_element_type=jnp.float32)
                        + b2_ref[...])

    return kernel


# ----------------------------------------------------------------------------
# Parameter init (PyTorch layout mirrored, deterministic)
# ----------------------------------------------------------------------------
def init_params(key, input_size, hidden_size, num_layers, forecast_horizon, noise_dim):
    H = hidden_size
    params = {"lstm": []}
    k_lstm = 1.0 / np.sqrt(H)

    def unif(key, shape, k):
        return jax.random.uniform(key, shape, jnp.float32, minval=-k, maxval=k)

    for layer in range(num_layers):
        din = input_size if layer == 0 else 2 * H
        layer_p = {}
        for d in ("f", "b"):
            key, k1, k2, k3, k4 = jax.random.split(key, 5)
            w_ih = unif(k1, (4 * H, din), k_lstm)      # PyTorch layout (4H, Din)
            w_hh = unif(k2, (4 * H, H), k_lstm)
            b_ih = unif(k3, (4 * H,), k_lstm)
            b_hh = unif(k4, (4 * H,), k_lstm)
            layer_p["wih_" + d] = w_ih.T               # (Din, 4H), gate order (i,f,g,o)
            layer_p["whh_" + d] = w_hh.T               # (H, 4H)
            layer_p["b_" + d] = (b_ih + b_hh).reshape(1, 4 * H)
        params["lstm"].append(layer_p)

    dec_in = 2 * H + noise_dim
    dec_hid = 2 * H
    dec_out = forecast_horizon * input_size
    key, k1, k2, k3, k4 = jax.random.split(key, 5)
    kd1 = 1.0 / np.sqrt(dec_in)
    kd2 = 1.0 / np.sqrt(dec_hid)
    params["w1"] = unif(k1, (dec_in, dec_hid), kd1)
    params["b1"] = unif(k2, (1, dec_hid), kd1)
    params["w2"] = unif(k3, (dec_hid, dec_out), kd2)
    params["b2"] = unif(k4, (1, dec_out), kd2)
    # BatchNorm1d(2H): gamma=1, beta=0, running_mean=0, running_var=1, eps=1e-5
    eps = 1e-5
    gamma = jnp.ones((dec_hid,), jnp.float32)
    beta = jnp.zeros((dec_hid,), jnp.float32)
    r_mean = jnp.zeros((dec_hid,), jnp.float32)
    r_var = jnp.ones((dec_hid,), jnp.float32)
    scale = gamma / jnp.sqrt(r_var + eps)
    shift = beta - r_mean * scale
    params["bn_scale"] = scale.reshape(1, dec_hid)
    params["bn_shift"] = shift.reshape(1, dec_hid)
    return params


# ----------------------------------------------------------------------------
# Pack params into kernel-ready layout (done once, offline)
# ----------------------------------------------------------------------------
def _split_gates(w, H):
    # last-axis gate order (i, f, g, o) -> four H-wide blocks
    return (w[..., 0:H], w[..., H:2 * H], w[..., 2 * H:3 * H], w[..., 3 * H:4 * H])


def pack_params(params, hidden_size, forecast_horizon, input_size, lane=128):
    """Repack PyTorch-layout params into the fused-kernel layout.

    * Gate columns go to [i_f i_b | f_f f_b | o_f o_b | g_f g_b]; sigmoid-gate
      (i,f,o) columns are pre-scaled by 0.5 so the kernel can use
      sigma(x) = 0.5*tanh(x/2)+0.5 with a single tanh pass.
    * Recurrent weights of both directions are packed block-diagonally so a
      single (B,2H)@(2H,8H) matmul per timestep drives both directions.
    * Eval-mode BatchNorm is folded into the second decoder linear.
    """
    H = hidden_size
    packed = {"lstm": []}
    for lp in params["lstm"]:
        iW_f, fW_f, gW_f, oW_f = _split_gates(lp["wih_f"], H)
        iW_b, fW_b, gW_b, oW_b = _split_gates(lp["wih_b"], H)
        wih_cat = jnp.concatenate(
            [0.5 * iW_f, 0.5 * iW_b, 0.5 * fW_f, 0.5 * fW_b,
             0.5 * oW_f, 0.5 * oW_b, gW_f, gW_b], axis=1)

        ib_f, fb_f, gb_f, ob_f = _split_gates(lp["b_f"], H)
        ib_b, fb_b, gb_b, ob_b = _split_gates(lp["b_b"], H)
        b_cat = jnp.concatenate(
            [0.5 * ib_f, 0.5 * ib_b, 0.5 * fb_f, 0.5 * fb_b,
             0.5 * ob_f, 0.5 * ob_b, gb_f, gb_b], axis=1)

        iR_f, fR_f, gR_f, oR_f = _split_gates(lp["whh_f"], H)
        iR_b, fR_b, gR_b, oR_b = _split_gates(lp["whh_b"], H)
        Z = jnp.zeros((H, H), jnp.float32)
        top = jnp.concatenate([0.5 * iR_f, Z, 0.5 * fR_f, Z,
                               0.5 * oR_f, Z, gR_f, Z], axis=1)
        bot = jnp.concatenate([Z, 0.5 * iR_b, Z, 0.5 * fR_b,
                               Z, 0.5 * oR_b, Z, gR_b], axis=1)
        whh_blk = jnp.concatenate([top, bot], axis=0)      # (2H, 8H) block-diagonal

        packed["lstm"].append({"wih_cat": wih_cat, "whh_blk": whh_blk, "b_cat": b_cat})

    # Decoder first linear: rows acting on [h_f | h_b] vs. rows acting on z.
    packed["w1h"] = params["w1"][:2 * H, :]
    packed["w1z"] = params["w1"][2 * H:, :]
    packed["b1"] = params["b1"]

    # Fold eval-mode BatchNorm (affine with running stats) into the second linear.
    scale = params["bn_scale"]                 # (1, 2H)
    shift = params["bn_shift"]                 # (1, 2H)
    w2 = params["w2"] * scale.reshape(-1, 1)
    b2 = shift @ params["w2"] + params["b2"]

    dec_out = forecast_horizon * input_size
    dec_out_pad = ((dec_out + lane - 1) // lane) * lane
    packed["w2"] = jnp.pad(w2, ((0, 0), (0, dec_out_pad - dec_out)))
    packed["b2"] = jnp.pad(b2, ((0, 0), (0, dec_out_pad - dec_out)))
    return packed


# ----------------------------------------------------------------------------
# Forward pass: one fused pallas_call, batch tiled over a parallel grid axis
# ----------------------------------------------------------------------------
def generator_cgan_forward(packed, x_cond, z, forecast_horizon, input_size):
    B, T, Din = x_cond.shape
    num_layers = len(packed["lstm"])
    H = packed["lstm"][0]["whh_blk"].shape[0] // 2
    dec_out = forecast_horizon * input_size
    dec_out_pad = packed["w2"].shape[1]
    noise_dim = packed["w1z"].shape[0]

    # Pad batch (sublane dim) to a multiple of 8 once; padded rows are independent
    # (no cross-batch coupling with eval-mode BN) and sliced off at the end.
    B_pad = ((B + 7) // 8) * 8
    x = x_cond.astype(jnp.float32)
    zf = z.astype(jnp.float32)
    if B_pad != B:
        x = jnp.pad(x, ((0, B_pad - B), (0, 0), (0, 0)))
        zf = jnp.pad(zf, ((0, B_pad - B), (0, 0)))

    # Megacore (v7x): split the batch into two parallel grid tiles when possible.
    n_bt = 2 if (B_pad % 16 == 0) else 1
    bb = B_pad // n_bt

    # Per-tile time-major flatten so the layer-0 projection is one matmul per tile.
    x_tiles = (x.reshape(n_bt, bb, T, Din)
                .transpose(0, 2, 1, 3)
                .reshape(n_bt, T * bb, Din))
    z_tiles = zf.reshape(n_bt, bb, noise_dim)

    args = [x_tiles, z_tiles]
    in_specs = [
        pl.BlockSpec((None, T * bb, Din), lambda i: (i, 0, 0)),
        pl.BlockSpec((None, bb, noise_dim), lambda i: (i, 0, 0)),
    ]

    def _full_spec(a):
        nd = a.ndim
        return pl.BlockSpec(a.shape, lambda i, nd=nd: (0,) * nd)

    for lp in packed["lstm"]:
        for k in ("wih_cat", "whh_blk", "b_cat"):
            args.append(lp[k])
            in_specs.append(_full_spec(lp[k]))
    for k in ("w1h", "w1z", "b1", "w2", "b2"):
        args.append(packed[k])
        in_specs.append(_full_spec(packed[k]))

    # VMEM budget: per-tile IO (double-buffered), whole weights, scratch, headroom.
    weight_bytes = sum(int(a.size) for a in args[2:]) * 4
    io_bytes = (int(x_tiles.size) // n_bt + int(z_tiles.size) // n_bt
                + bb * dec_out_pad) * 4 * 2
    scratch_bytes = (T * bb * 2 * H + T * bb * 8 * H) * 4
    est = weight_bytes + io_bytes + scratch_bytes
    vmem_limit = int(min(max(2 * est, 32 * 1024 * 1024), 64 * 1024 * 1024))

    kernel = _make_fused_kernel(num_layers, T, bb, H)
    out = pl.pallas_call(
        kernel,
        grid=(n_bt,),
        out_shape=jax.ShapeDtypeStruct((n_bt, bb, dec_out_pad), jnp.float32),
        in_specs=in_specs,
        out_specs=pl.BlockSpec((None, bb, dec_out_pad), lambda i: (i, 0, 0)),
        scratch_shapes=[
            pltpu.VMEM((T * bb, 2 * H), jnp.float32),   # next-layer input sequence
            pltpu.VMEM((T * bb, 8 * H), jnp.float32),   # hoisted gate projections
        ],
        compiler_params=pltpu.CompilerParams(
            dimension_semantics=("parallel",),
            vmem_limit_bytes=vmem_limit),
    )(*args)
    out = out.reshape(B_pad, dec_out_pad)
    return out[:B, :dec_out].reshape(B, forecast_horizon, input_size)


# ----------------------------------------------------------------------------
# Pure-JAX reference (same math, no Pallas) for a sanity check
# ----------------------------------------------------------------------------
def _reference_forward(params, x_cond, z, forecast_horizon, input_size):
    def run_dir(x_tbd, wih, whh, b, reverse):
        T, B, _ = x_tbd.shape
        H = whh.shape[0]
        order = range(T - 1, -1, -1) if reverse else range(T)
        h = jnp.zeros((B, H), jnp.float32)
        c = jnp.zeros((B, H), jnp.float32)
        outs = [None] * T
        for t in order:
            g = x_tbd[t] @ wih + h @ whh + b
            i = jax.nn.sigmoid(g[:, :H])
            f = jax.nn.sigmoid(g[:, H:2 * H])
            gg = jnp.tanh(g[:, 2 * H:3 * H])
            o = jax.nn.sigmoid(g[:, 3 * H:])
            c = f * c + i * gg
            h = o * jnp.tanh(c)
            outs[t] = h
        return jnp.stack(outs, axis=0), h

    layer_in = jnp.transpose(x_cond, (1, 0, 2)).astype(jnp.float32)
    h_f = h_b = None
    for lp in params["lstm"]:
        sf, h_f = run_dir(layer_in, lp["wih_f"], lp["whh_f"], lp["b_f"], False)
        sb, h_b = run_dir(layer_in, lp["wih_b"], lp["whh_b"], lp["b_b"], True)
        layer_in = jnp.concatenate([sf, sb], axis=-1)
    ctx = jnp.concatenate([h_f, h_b, z.astype(jnp.float32)], axis=1)
    h = jnp.maximum(ctx @ params["w1"] + params["b1"], 0.0)
    h = h * params["bn_scale"] + params["bn_shift"]
    out = h @ params["w2"] + params["b2"]
    return out.reshape(x_cond.shape[0], forecast_horizon, input_size)


# ----------------------------------------------------------------------------
if __name__ == "__main__":
    INPUT_SIZE = 4
    HIDDEN_SIZE = 32
    NUM_LAYERS = 2
    FORECAST_HORIZON = 6
    NOISE_DIM = 8
    BATCH = 2
    SEQ_LEN = 8

    key = jax.random.PRNGKey(0)
    key, kp, kx, kz = jax.random.split(key, 4)
    params = init_params(kp, INPUT_SIZE, HIDDEN_SIZE, NUM_LAYERS,
                         FORECAST_HORIZON, NOISE_DIM)
    packed = pack_params(params, HIDDEN_SIZE, FORECAST_HORIZON, INPUT_SIZE)

    x_cond = jax.random.normal(kx, (BATCH, SEQ_LEN, INPUT_SIZE), jnp.float32)
    z = jax.random.normal(kz, (BATCH, NOISE_DIM), jnp.float32)

    forward = jax.jit(generator_cgan_forward, static_argnums=(3, 4))
    out = forward(packed, x_cond, z, FORECAST_HORIZON, INPUT_SIZE)
    out = jax.block_until_ready(out)

    assert out.shape == (BATCH, FORECAST_HORIZON, INPUT_SIZE)
    ref = _reference_forward(params, x_cond, z, FORECAST_HORIZON, INPUT_SIZE)
    np.testing.assert_allclose(np.asarray(out), np.asarray(ref), rtol=5e-3, atol=5e-3)

    print("KERNEL_OK")
</pallas_src>

<mosaic_0001>
module attributes {stable_mosaic.version = 11 : i64} {
  func.func @kernel(%arg0: i32, %arg1: memref<1x64x4xf32, #tpu.memory_space<vmem>>, %arg2: memref<1x8x8xf32, #tpu.memory_space<vmem>>, %arg3: memref<4x256xf32, #tpu.memory_space<vmem>>, %arg4: memref<64x256xf32, #tpu.memory_space<vmem>>, %arg5: memref<1x256xf32, #tpu.memory_space<vmem>>, %arg6: memref<64x256xf32, #tpu.memory_space<vmem>>, %arg7: memref<64x256xf32, #tpu.memory_space<vmem>>, %arg8: memref<1x256xf32, #tpu.memory_space<vmem>>, %arg9: memref<64x64xf32, #tpu.memory_space<vmem>>, %arg10: memref<8x64xf32, #tpu.memory_space<vmem>>, %arg11: memref<1x64xf32, #tpu.memory_space<vmem>>, %arg12: memref<64x128xf32, #tpu.memory_space<vmem>>, %arg13: memref<1x128xf32, #tpu.memory_space<vmem>>, %arg14: memref<1x8x128xf32, #tpu.memory_space<vmem>>, %arg15: memref<64x64xf32, #tpu.memory_space<vmem>>, %arg16: memref<64x256xf32, #tpu.memory_space<vmem>>) attributes {dimension_semantics = [#tpu.dimension_semantics<parallel>], iteration_bounds = array<i64: 1>, scalar_prefetch = 0 : i64, scratch_operands = 2 : i64, tpu.core_type = #tpu.core_type<tc>, window_params = [{transform_indices = @transform_0, window_bounds = array<i64: 1, 64, 4>}, {transform_indices = @transform_1, window_bounds = array<i64: 1, 8, 8>}, {pipeline_mode = #tpu.pipeline_mode<synchronous>, transform_indices = @transform_2, window_bounds = array<i64: 4, 256>}, {pipeline_mode = #tpu.pipeline_mode<synchronous>, transform_indices = @transform_3, window_bounds = array<i64: 64, 256>}, {pipeline_mode = #tpu.pipeline_mode<synchronous>, transform_indices = @transform_4, window_bounds = array<i64: 1, 256>}, {pipeline_mode = #tpu.pipeline_mode<synchronous>, transform_indices = @transform_5, window_bounds = array<i64: 64, 256>}, {pipeline_mode = #tpu.pipeline_mode<synchronous>, transform_indices = @transform_6, window_bounds = array<i64: 64, 256>}, {pipeline_mode = #tpu.pipeline_mode<synchronous>, transform_indices = @transform_7, window_bounds = array<i64: 1, 256>}, {pipeline_mode = #tpu.pipeline_mode<synchronous>, transform_indices = @transform_8, window_bounds = array<i64: 64, 64>}, {pipeline_mode = #tpu.pipeline_mode<synchronous>, transform_indices = @transform_9, window_bounds = array<i64: 8, 64>}, {pipeline_mode = #tpu.pipeline_mode<synchronous>, transform_indices = @transform_10, window_bounds = array<i64: 1, 64>}, {pipeline_mode = #tpu.pipeline_mode<synchronous>, transform_indices = @transform_11, window_bounds = array<i64: 64, 128>}, {pipeline_mode = #tpu.pipeline_mode<synchronous>, transform_indices = @transform_12, window_bounds = array<i64: 1, 128>}, {transform_indices = @transform_13, window_bounds = array<i64: 1, 8, 128>}]} {
    %0 = tpu.iota {dimensions = array<i32: 1>} : vector<8x256xi32>
    %c192_i32 = arith.constant 192 : i32
    %1 = vector.broadcast %c192_i32 : i32 to vector<8x256xi32>
    %2 = arith.cmpi slt, %0, %1 : vector<8x256xi32>
    %c64_i32 = arith.constant 64 : i32
    %c0_i32 = arith.constant 0 : i32
    %3 = arith.cmpi eq, %c64_i32, %c0_i32 : i32
    %c1_i32 = arith.constant 1 : i32
    %4 = arith.select %3, %c1_i32, %c64_i32 : i32
    %5 = vector.broadcast %4 : i32 to vector<8x256xi32>
    %6 = arith.remsi %0, %5 : vector<8x256xi32>
    %c0_i32_0 = arith.constant 0 : i32
    %7 = vector.broadcast %c0_i32_0 : i32 to vector<8x256xi32>
    %8 = arith.cmpi ne, %6, %7 : vector<8x256xi32>
    %c0_i32_1 = arith.constant 0 : i32
    %9 = vector.broadcast %c0_i32_1 : i32 to vector<8x256xi32>
    %10 = arith.cmpi slt, %6, %9 : vector<8x256xi32>
    %c0_i32_2 = arith.constant 0 : i32
    %11 = arith.cmpi slt, %4, %c0_i32_2 : i32
    %12 = vector.broadcast %11 : i1 to vector<8x256xi1>
    %13 = vector.broadcast %12 : vector<8x256xi1> to vector<8x256xi1>
    %14 = arith.xori %10, %13 : vector<8x256xi1>
    %15 = arith.andi %14, %8 : vector<8x256xi1>
    %16 = vector.broadcast %4 : i32 to vector<8x256xi32>
    %17 = arith.addi %6, %16 : vector<8x256xi32>
    %18 = arith.select %15, %17, %6 : vector<8x256xi1>, vector<8x256xi32>
    %c32_i32 = arith.constant 32 : i32
    %19 = vector.broadcast %c32_i32 : i32 to vector<8x256xi32>
    %20 = arith.cmpi slt, %18, %19 : vector<8x256xi32>
    %c0 = arith.constant 0 : index
    %c0_3 = arith.constant 0 : index
    %c0_4 = arith.constant 0 : index
    %21 = vector.load %arg1[%c0, %c0_3, %c0_4] : memref<1x64x4xf32, #tpu.memory_space<vmem>>, vector<1x64x4xf32>
    %22 = vector.shape_cast %21 : vector<1x64x4xf32> to vector<64x4xf32>
    %c0_5 = arith.constant 0 : index
    %c0_6 = arith.constant 0 : index
    %23 = vector.load %arg3[%c0_5, %c0_6] : memref<4x256xf32, #tpu.memory_space<vmem>>, vector<4x256xf32>
    %cst = arith.constant dense<0.000000e+00> : vector<64x256xf32>
    %24 = tpu.matmul %22, %23, %cst {dimension_numbers = #tpu.dot_dimension_numbers<[1], [0], [0], [1], [0, 0, 1, 1], [], []>} : vector<64x4xf32>, vector<4x256xf32>, vector<64x256xf32> -> vector<64x256xf32>
    %c0_7 = arith.constant 0 : index
    %c0_8 = arith.constant 0 : index
    %25 = vector.load %arg5[%c0_7, %c0_8] : memref<1x256xf32, #tpu.memory_space<vmem>>, vector<1x256xf32>
    %26 = vector.broadcast %25 : vector<1x256xf32> to vector<64x256xf32>
    %27 = arith.addf %24, %26 : vector<64x256xf32>
    %c0_9 = arith.constant 0 : index
    %c0_10 = arith.constant 0 : index
    %28 = vector.load %arg16[%c0_9, %c0_10] : memref<64x256xf32, #tpu.memory_space<vmem>>, vector<64x256xf32>
    tpu.vector_store %arg16[%c0_9, %c0_10], %27 {strides = array<i32>} : memref<64x256xf32, #tpu.memory_space<vmem>>, vector<64x256xf32>,
    %c0_11 = arith.constant 0 : index
    %c0_12 = arith.constant 0 : index
    %29 = vector.load %arg4[%c0_11, %c0_12] : memref<64x256xf32, #tpu.memory_space<vmem>>, vector<64x256xf32>
    %cst_13 = arith.constant 0.000000e+00 : f32
    %30 = vector.broadcast %cst_13 : f32 to vector<8x64xf32>
    %cst_14 = arith.constant 0.000000e+00 : f32
    %31 = vector.broadcast %cst_14 : f32 to vector<8x64xf32>
    %c0_15 = arith.constant 0 : index
    %c0_16 = arith.constant 0 : index
    %32 = vector.load %arg16[%c0_15, %c0_16] : memref<64x256xf32, #tpu.memory_space<vmem>>, vector<8x256xf32>
    %c56 = arith.constant 56 : index
    %c0_17 = arith.constant 0 : index
    %33 = vector.load %arg16[%c56, %c0_17] : memref<64x256xf32, #tpu.memory_space<vmem>>, vector<8x256xf32>
    %34 = arith.select %20, %32, %33 : vector<8x256xi1>, vector<8x256xf32>
    %cst_18 = arith.constant dense<0.000000e+00> : vector<8x256xf32>
    %35 = tpu.matmul %30, %29, %cst_18 {dimension_numbers = #tpu.dot_dimension_numbers<[1], [0], [0], [1], [0, 0, 1, 1], [], []>} : vector<8x64xf32>, vector<64x256xf32>, vector<8x256xf32> -> vector<8x256xf32>
    %36 = arith.addf %34, %35 : vector<8x256xf32>
    %37 = math.tanh %36 : vector<8x256xf32>
    %cst_19 = arith.constant 5.000000e-01 : f32
    %38 = vector.broadcast %cst_19 : f32 to vector<8x256xf32>
    %39 = arith.mulf %38, %37 : vector<8x256xf32>
    %cst_20 = arith.constant 5.000000e-01 : f32
    %40 = vector.broadcast %cst_20 : f32 to vector<8x256xf32>
    %41 = arith.addf %39, %40 : vector<8x256xf32>
    %42 = arith.select %2, %41, %37 : vector<8x256xi1>, vector<8x256xf32>
    %43 = vector.extract_strided_slice %42 {offsets = [0, 0], sizes = [8, 64], strides = [1, 1]} : vector<8x256xf32> to vector<8x64xf32>
    %44 = vector.extract_strided_slice %42 {offsets = [0, 64], sizes = [8, 64], strides = [1, 1]} : vector<8x256xf32> to vector<8x64xf32>
    %45 = vector.extract_strided_slice %42 {offsets = [0, 128], sizes = [8, 64], strides = [1, 1]} : vector<8x256xf32> to vector<8x64xf32>
    %46 = vector.extract_strided_slice %42 {offsets = [0, 192], sizes = [8, 64], strides = [1, 1]} : vector<8x256xf32> to vector<8x64xf32>
    %47 = arith.mulf %44, %31 : vector<8x64xf32>
    %48 = arith.mulf %43, %46 : vector<8x64xf32>
    %49 = arith.addf %47, %48 : vector<8x64xf32>
    %50 = math.tanh %49 : vector<8x64xf32>
    %51 = arith.mulf %45, %50 : vector<8x64xf32>
    %52 = vector.extract_strided_slice %51 {offsets = [0, 0], sizes = [8, 32], strides = [1, 1]} : vector<8x64xf32> to vector<8x32xf32>
    %c0_21 = arith.constant 0 : index
    %c0_22 = arith.constant 0 : index
    %53 = vector.load %arg15[%c0_21, %c0_22] : memref<64x64xf32, #tpu.memory_space<vmem>>, vector<8x32xf32>
    tpu.vector_store %arg15[%c0_21, %c0_22], %52 {strides = array<i32>} : memref<64x64xf32, #tpu.memory_space<vmem>>, vector<8x32xf32>,
    %54 = vector.extract_strided_slice %51 {offsets = [0, 32], sizes = [8, 32], strides = [1, 1]} : vector<8x64xf32> to vector<8x32xf32>
    %c56_23 = arith.constant 56 : index
    %c32 = arith.constant 32 : index
    %55 = vector.load %arg15[%c56_23, %c32] : memref<64x64xf32, #tpu.memory_space<vmem>>, vector<8x32xf32>
    tpu.vector_store %arg15[%c56_23, %c32], %54 {strides = array<i32>} : memref<64x64xf32, #tpu.memory_space<vmem>>, vector<8x32xf32>,
    %c8 = arith.constant 8 : index
    %c0_24 = arith.constant 0 : index
    %56 = vector.load %arg16[%c8, %c0_24] : memref<64x256xf32, #tpu.memory_space<vmem>>, vector<8x256xf32>
    %c48 = arith.constant 48 : index
    %c0_25 = arith.constant 0 : index
    %57 = vector.load %arg16[%c48, %c0_25] : memref<64x256xf32, #tpu.memory_space<vmem>>, vector<8x256xf32>
    %58 = arith.select %20, %56, %57 : vector<8x256xi1>, vector<8x256xf32>
    %cst_26 = arith.constant dense<0.000000e+00> : vector<8x256xf32>
    %59 = tpu.matmul %51, %29, %cst_26 {dimension_numbers = #tpu.dot_dimension_numbers<[1], [0], [0], [1], [0, 0, 1, 1], [], []>} : vector<8x64xf32>, vector<64x256xf32>, vector<8x256xf32> -> vector<8x256xf32>
    %60 = arith.addf %58, %59 : vector<8x256xf32>
    %61 = math.tanh %60 : vector<8x256xf32>
    %cst_27 = arith.constant 5.000000e-01 : f32
    %62 = vector.broadcast %cst_27 : f32 to vector<8x256xf32>
    %63 = arith.mulf %62, %61 : vector<8x256xf32>
    %cst_28 = arith.constant 5.000000e-01 : f32
    %64 = vector.broadcast %cst_28 : f32 to vector<8x256xf32>
    %65 = arith.addf %63, %64 : vector<8x256xf32>
    %66 = arith.select %2, %65, %61 : vector<8x256xi1>, vector<8x256xf32>
    %67 = vector.extract_strided_slice %66 {offsets = [0, 0], sizes = [8, 64], strides = [1, 1]} : vector<8x256xf32> to vector<8x64xf32>
    %68 = vector.extract_strided_slice %66 {offsets = [0, 64], sizes = [8, 64], strides = [1, 1]} : vector<8x256xf32> to vector<8x64xf32>
    %69 = vector.extract_strided_slice %66 {offsets = [0, 128], sizes = [8, 64], strides = [1, 1]} : vector<8x256xf32> to vector<8x64xf32>
    %70 = vector.extract_strided_slice %66 {offsets = [0, 192], sizes = [8, 64], strides = [1, 1]} : vector<8x256xf32> to vector<8x64xf32>
    %71 = arith.mulf %68, %49 : vector<8x64xf32>
    %72 = arith.mulf %67, %70 : vector<8x64xf32>
    %73 = arith.addf %71, %72 : vector<8x64xf32>
    %74 = math.tanh %73 : vector<8x64xf32>
    %75 = arith.mulf %69, %74 : vector<8x64xf32>
    %76 = vector.extract_strided_slice %75 {offsets = [0, 0], sizes = [8, 32], strides = [1, 1]} : vector<8x64xf32> to vector<8x32xf32>
    %c8_29 = arith.constant 8 : index
    %c0_30 = arith.constant 0 : index
    %77 = vector.load %arg15[%c8_29, %c0_30] : memref<64x64xf32, #tpu.memory_space<vmem>>, vector<8x32xf32>
    tpu.vector_store %arg15[%c8_29, %c0_30], %76 {strides = array<i32>} : memref<64x64xf32, #tpu.memory_space<vmem>>, vector<8x32xf32>,
    %78 = vector.extract_strided_slice %75 {offsets = [0, 32], sizes = [8, 32], strides = [1, 1]} : vector<8x64xf32> to vector<8x32xf32>
    %c48_31 = arith.constant 48 : index
    %c32_32 = arith.constant 32 : index
    %79 = vector.load %arg15[%c48_31, %c32_32] : memref<64x64xf32, #tpu.memory_space<vmem>>, vector<8x32xf32>
    tpu.vector_store %arg15[%c48_31, %c32_32], %78 {strides = array<i32>} : memref<64x64xf32, #tpu.memory_space<vmem>>, vector<8x32xf32>,
    %c16 = arith.constant 16 : index
    %c0_33 = arith.constant 0 : index
    %80 = vector.load %arg16[%c16, %c0_33] : memref<64x256xf32, #tpu.memory_space<vmem>>, vector<8x256xf32>
    %c40 = arith.constant 40 : index
    %c0_34 = arith.constant 0 : index
    %81 = vector.load %arg16[%c40, %c0_34] : memref<64x256xf32, #tpu.memory_space<vmem>>, vector<8x256xf32>
    %82 = arith.select %20, %80, %81 : vector<8x256xi1>, vector<8x256xf32>
    %cst_35 = arith.constant dense<0.000000e+00> : vector<8x256xf32>
    %83 = tpu.matmul %75, %29, %cst_35 {dimension_numbers = #tpu.dot_dimension_numbers<[1], [0], [0], [1], [0, 0, 1, 1], [], []>} : vector<8x64xf32>, vector<64x256xf32>, vector<8x256xf32> -> vector<8x256xf32>
    %84 = arith.addf %82, %83 : vector<8x256xf32>
    %85 = math.tanh %84 : vector<8x256xf32>
    %cst_36 = arith.constant 5.000000e-01 : f32
    %86 = vector.broadcast %cst_36 : f32 to vector<8x256xf32>
    %87 = arith.mulf %86, %85 : vector<8x256xf32>
    %cst_37 = arith.constant 5.000000e-01 : f32
    %88 = vector.broadcast %cst_37 : f32 to vector<8x256xf32>
    %89 = arith.addf %87, %88 : vector<8x256xf32>
    %90 = arith.select %2, %89, %85 : vector<8x256xi1>, vector<8x256xf32>
    %91 = vector.extract_strided_slice %90 {offsets = [0, 0], sizes = [8, 64], strides = [1, 1]} : vector<8x256xf32> to vector<8x64xf32>
    %92 = vector.extract_strided_slice %90 {offsets = [0, 64], sizes = [8, 64], strides = [1, 1]} : vector<8x256xf32> to vector<8x64xf32>
    %93 = vector.extract_strided_slice %90 {offsets = [0, 128], sizes = [8, 64], strides = [1, 1]} : vector<8x256xf32> to vector<8x64xf32>
    %94 = vector.extract_strided_slice %90 {offsets = [0, 192], sizes = [8, 64], strides = [1, 1]} : vector<8x256xf32> to vector<8x64xf32>
    %95 = arith.mulf %92, %73 : vector<8x64xf32>
    %96 = arith.mulf %91, %94 : vector<8x64xf32>
    %97 = arith.addf %95, %96 : vector<8x64xf32>
    %98 = math.tanh %97 : vector<8x64xf32>
    %99 = arith.mulf %93, %98 : vector<8x64xf32>
    %100 = vector.extract_strided_slice %99 {offsets = [0, 0], sizes = [8, 32], strides = [1, 1]} : vector<8x64xf32> to vector<8x32xf32>
    %c16_38 = arith.constant 16 : index
    %c0_39 = arith.constant 0 : index
    %101 = vector.load %arg15[%c16_38, %c0_39] : memref<64x64xf32, #tpu.memory_space<vmem>>, vector<8x32xf32>
    tpu.vector_store %arg15[%c16_38, %c0_39], %100 {strides = array<i32>} : memref<64x64xf32, #tpu.memory_space<vmem>>, vector<8x32xf32>,
    %102 = vector.extract_strided_slice %99 {offsets = [0, 32], sizes = [8, 32], strides = [1, 1]} : vector<8x64xf32> to vector<8x32xf32>
    %c40_40 = arith.constant 40 : index
    %c32_41 = arith.constant 32 : index
    %103 = vector.load %arg15[%c40_40, %c32_41] : memref<64x64xf32, #tpu.memory_space<vmem>>, vector<8x32xf32>
    tpu.vector_store %arg15[%c40_40, %c32_41], %102 {strides = array<i32>} : memref<64x64xf32, #tpu.memory_space<vmem>>, vector<8x32xf32>,
    %c24 = arith.constant 24 : index
    %c0_42 = arith.constant 0 : index
    %104 = vector.load %arg16[%c24, %c0_42] : memref<64x256xf32, #tpu.memory_space<vmem>>, vector<8x256xf32>
    %c32_43 = arith.constant 32 : index
    %c0_44 = arith.constant 0 : index
    %105 = vector.load %arg16[%c32_43, %c0_44] : memref<64x256xf32, #tpu.memory_space<vmem>>, vector<8x256xf32>
    %106 = arith.select %20, %104, %105 : vector<8x256xi1>, vector<8x256xf32>
    %cst_45 = arith.constant dense<0.000000e+00> : vector<8x256xf32>
    %107 = tpu.matmul %99, %29, %cst_45 {dimension_numbers = #tpu.dot_dimension_numbers<[1], [0], [0], [1], [0, 0, 1, 1], [], []>} : vector<8x64xf32>, vector<64x256xf32>, vector<8x256xf32> -> vector<8x256xf32>
    %108 = arith.addf %106, %107 : vector<8x256xf32>
    %109 = math.tanh %108 : vector<8x256xf32>
    %cst_46 = arith.constant 5.000000e-01 : f32
    %110 = vector.broadcast %cst_46 : f32 to vector<8x256xf32>
    %111 = arith.mulf %110, %109 : vector<8x256xf32>
    %cst_47 = arith.constant 5.000000e-01 : f32
    %112 = vector.broadcast %cst_47 : f32 to vector<8x256xf32>
    %113 = arith.addf %111, %112 : vector<8x256xf32>
    %114 = arith.select %2, %113, %109 : vector<8x256xi1>, vector<8x256xf32>
    %115 = vector.extract_strided_slice %114 {offsets = [0, 0], sizes = [8, 64], strides = [1, 1]} : vector<8x256xf32> to vector<8x64xf32>
    %116 = vector.extract_strided_slice %114 {offsets = [0, 64], sizes = [8, 64], strides = [1, 1]} : vector<8x256xf32> to vector<8x64xf32>
    %117 = vector.extract_strided_slice %114 {offsets = [0, 128], sizes = [8, 64], strides = [1, 1]} : vector<8x256xf32> to vector<8x64xf32>
    %118 = vector.extract_strided_slice %114 {offsets = [0, 192], sizes = [8, 64], strides = [1, 1]} : vector<8x256xf32> to vector<8x64xf32>
    %119 = arith.mulf %116, %97 : vector<8x64xf32>
    %120 = arith.mulf %115, %118 : vector<8x64xf32>
    %121 = arith.addf %119, %120 : vector<8x64xf32>
    %122 = math.tanh %121 : vector<8x64xf32>
    %123 = arith.mulf %117, %122 : vector<8x64xf32>
    %124 = vector.extract_strided_slice %123 {offsets = [0, 0], sizes = [8, 32], strides = [1, 1]} : vector<8x64xf32> to vector<8x32xf32>
    %c24_48 = arith.constant 24 : index
    %c0_49 = arith.constant 0 : index
    %125 = vector.load %arg15[%c24_48, %c0_49] : memref<64x64xf32, #tpu.memory_space<vmem>>, vector<8x32xf32>
    tpu.vector_store %arg15[%c24_48, %c0_49], %124 {strides = array<i32>} : memref<64x64xf32, #tpu.memory_space<vmem>>, vector<8x32xf32>,
    %126 = vector.extract_strided_slice %123 {offsets = [0, 32], sizes = [8, 32], strides = [1, 1]} : vector<8x64xf32> to vector<8x32xf32>
    %c32_50 = arith.constant 32 : index
    %c32_51 = arith.constant 32 : index
    %127 = vector.load %arg15[%c32_50, %c32_51] : memref<64x64xf32, #tpu.memory_space<vmem>>, vector<8x32xf32>
    tpu.vector_store %arg15[%c32_50, %c32_51], %126 {strides = array<i32>} : memref<64x64xf32, #tpu.memory_space<vmem>>, vector<8x32xf32>,
    %c32_52 = arith.constant 32 : index
    %c0_53 = arith.constant 0 : index
    %128 = vector.load %arg16[%c32_52, %c0_53] : memref<64x256xf32, #tpu.memory_space<vmem>>, vector<8x256xf32>
    %c24_54 = arith.constant 24 : index
    %c0_55 = arith.constant 0 : index
    %129 = vector.load %arg16[%c24_54, %c0_55] : memref<64x256xf32, #tpu.memory_space<vmem>>, vector<8x256xf32>
    %130 = arith.select %20, %128, %129 : vector<8x256xi1>, vector<8x256xf32>
    %cst_56 = arith.constant dense<0.000000e+00> : vector<8x256xf32>
    %131 = tpu.matmul %123, %29, %cst_56 {dimension_numbers = #tpu.dot_dimension_numbers<[1], [0], [0], [1], [0, 0, 1, 1], [], []>} : vector<8x64xf32>, vector<64x256xf32>, vector<8x256xf32> -> vector<8x256xf32>
    %132 = arith.addf %130, %131 : vector<8x256xf32>
    %133 = math.tanh %132 : vector<8x256xf32>
    %cst_57 = arith.constant 5.000000e-01 : f32
    %134 = vector.broadcast %cst_57 : f32 to vector<8x256xf32>
    %135 = arith.mulf %134, %133 : vector<8x256xf32>
    %cst_58 = arith.constant 5.000000e-01 : f32
    %136 = vector.broadcast %cst_58 : f32 to vector<8x256xf32>
    %137 = arith.addf %135, %136 : vector<8x256xf32>
    %138 = arith.select %2, %137, %133 : vector<8x256xi1>, vector<8x256xf32>
    %139 = vector.extract_strided_slice %138 {offsets = [0, 0], sizes = [8, 64], strides = [1, 1]} : vector<8x256xf32> to vector<8x64xf32>
    %140 = vector.extract_strided_slice %138 {offsets = [0, 64], sizes = [8, 64], strides = [1, 1]} : vector<8x256xf32> to vector<8x64xf32>
    %141 = vector.extract_strided_slice %138 {offsets = [0, 128], sizes = [8, 64], strides = [1, 1]} : vector<8x256xf32> to vector<8x64xf32>
    %142 = vector.extract_strided_slice %138 {offsets = [0, 192], sizes = [8, 64], strides = [1, 1]} : vector<8x256xf32> to vector<8x64xf32>
    %143 = arith.mulf %140, %121 : vector<8x64xf32>
    %144 = arith.mulf %139, %142 : vector<8x64xf32>
    %145 = arith.addf %143, %144 : vector<8x64xf32>
    %146 = math.tanh %145 : vector<8x64xf32>
    %147 = arith.mulf %141, %146 : vector<8x64xf32>
    %148 = vector.extract_strided_slice %147 {offsets = [0, 0], sizes = [8, 32], strides = [1, 1]} : vector<8x64xf32> to vector<8x32xf32>
    %c32_59 = arith.constant 32 : index
    %c0_60 = arith.constant 0 : index
    %149 = vector.load %arg15[%c32_59, %c0_60] : memref<64x64xf32, #tpu.memory_space<vmem>>, vector<8x32xf32>
    tpu.vector_store %arg15[%c32_59, %c0_60], %148 {strides = array<i32>} : memref<64x64xf32, #tpu.memory_space<vmem>>, vector<8x32xf32>,
    %150 = vector.extract_strided_slice %147 {offsets = [0, 32], sizes = [8, 32], strides = [1, 1]} : vector<8x64xf32> to vector<8x32xf32>
    %c24_61 = arith.constant 24 : index
    %c32_62 = arith.constant 32 : index
    %151 = vector.load %arg15[%c24_61, %c32_62] : memref<64x64xf32, #tpu.memory_space<vmem>>, vector<8x32xf32>
    tpu.vector_store %arg15[%c24_61, %c32_62], %150 {strides = array<i32>} : memref<64x64xf32, #tpu.memory_space<vmem>>, vector<8x32xf32>,
    %c40_63 = arith.constant 40 : index
    %c0_64 = arith.constant 0 : index
    %152 = vector.load %arg16[%c40_63, %c0_64] : memref<64x256xf32, #tpu.memory_space<vmem>>, vector<8x256xf32>
    %c16_65 = arith.constant 16 : index
    %c0_66 = arith.constant 0 : index
    %153 = vector.load %arg16[%c16_65, %c0_66] : memref<64x256xf32, #tpu.memory_space<vmem>>, vector<8x256xf32>
    %154 = arith.select %20, %152, %153 : vector<8x256xi1>, vector<8x256xf32>
    %cst_67 = arith.constant dense<0.000000e+00> : vector<8x256xf32>
    %155 = tpu.matmul %147, %29, %cst_67 {dimension_numbers = #tpu.dot_dimension_numbers<[1], [0], [0], [1], [0, 0, 1, 1], [], []>} : vector<8x64xf32>, vector<64x256xf32>, vector<8x256xf32> -> vector<8x256xf32>
    %156 = arith.addf %154, %155 : vector<8x256xf32>
    %157 = math.tanh %156 : vector<8x256xf32>
    %cst_68 = arith.constant 5.000000e-01 : f32
    %158 = vector.broadcast %cst_68 : f32 to vector<8x256xf32>
    %159 = arith.mulf %158, %157 : vector<8x256xf32>
    %cst_69 = arith.constant 5.000000e-01 : f32
    %160 = vector.broadcast %cst_69 : f32 to vector<8x256xf32>
    %161 = arith.addf %159, %160 : vector<8x256xf32>
    %162 = arith.select %2, %161, %157 : vector<8x256xi1>, vector<8x256xf32>
    %163 = vector.extract_strided_slice %162 {offsets = [0, 0], sizes = [8, 64], strides = [1, 1]} : vector<8x256xf32> to vector<8x64xf32>
    %164 = vector.extract_strided_slice %162 {offsets = [0, 64], sizes = [8, 64], strides = [1, 1]} : vector<8x256xf32> to vector<8x64xf32>
    %165 = vector.extract_strided_slice %162 {offsets = [0, 128], sizes = [8, 64], strides = [1, 1]} : vector<8x256xf32> to vector<8x64xf32>
    %166 = vector.extract_strided_slice %162 {offsets = [0, 192], sizes = [8, 64], strides = [1, 1]} : vector<8x256xf32> to vector<8x64xf32>
    %167 = arith.mulf %164, %145 : vector<8x64xf32>
    %168 = arith.mulf %163, %166 : vector<8x64xf32>
    %169 = arith.addf %167, %168 : vector<8x64xf32>
    %170 = math.tanh %169 : vector<8x64xf32>
    %171 = arith.mulf %165, %170 : vector<8x64xf32>
    %172 = vector.extract_strided_slice %171 {offsets = [0, 0], sizes = [8, 32], strides = [1, 1]} : vector<8x64xf32> to vector<8x32xf32>
    %c40_70 = arith.constant 40 : index
    %c0_71 = arith.constant 0 : index
    %173 = vector.load %arg15[%c40_70, %c0_71] : memref<64x64xf32, #tpu.memory_space<vmem>>, vector<8x32xf32>
    tpu.vector_store %arg15[%c40_70, %c0_71], %172 {strides = array<i32>} : memref<64x64xf32, #tpu.memory_space<vmem>>, vector<8x32xf32>,
    %174 = vector.extract_strided_slice %171 {offsets = [0, 32], sizes = [8, 32], strides = [1, 1]} : vector<8x64xf32> to vector<8x32xf32>
    %c16_72 = arith.constant 16 : index
    %c32_73 = arith.constant 32 : index
    %175 = vector.load %arg15[%c16_72, %c32_73] : memref<64x64xf32, #tpu.memory_space<vmem>>, vector<8x32xf32>
    tpu.vector_store %arg15[%c16_72, %c32_73], %174 {strides = array<i32>} : memref<64x64xf32, #tpu.memory_space<vmem>>, vector<8x32xf32>,
    %c48_74 = arith.constant 48 : index
    %c0_75 = arith.constant 0 : index
    %176 = vector.load %arg16[%c48_74, %c0_75] : memref<64x256xf32, #tpu.memory_space<vmem>>, vector<8x256xf32>
    %c8_76 = arith.constant 8 : index
    %c0_77 = arith.constant 0 : index
    %177 = vector.load %arg16[%c8_76, %c0_77] : memref<64x256xf32, #tpu.memory_space<vmem>>, vector<8x256xf32>
    %178 = arith.select %20, %176, %177 : vector<8x256xi1>, vector<8x256xf32>
    %cst_78 = arith.constant dense<0.000000e+00> : vector<8x256xf32>
    %179 = tpu.matmul %171, %29, %cst_78 {dimension_numbers = #tpu.dot_dimension_numbers<[1], [0], [0], [1], [0, 0, 1, 1], [], []>} : vector<8x64xf32>, vector<64x256xf32>, vector<8x256xf32> -> vector<8x256xf32>
    %180 = arith.addf %178, %179 : vector<8x256xf32>
    %181 = math.tanh %180 : vector<8x256xf32>
    %cst_79 = arith.constant 5.000000e-01 : f32
    %182 = vector.broadcast %cst_79 : f32 to vector<8x256xf32>
    %183 = arith.mulf %182, %181 : vector<8x256xf32>
    %cst_80 = arith.constant 5.000000e-01 : f32
    %184 = vector.broadcast %cst_80 : f32 to vector<8x256xf32>
    %185 = arith.addf %183, %184 : vector<8x256xf32>
    %186 = arith.select %2, %185, %181 : vector<8x256xi1>, vector<8x256xf32>
    %187 = vector.extract_strided_slice %186 {offsets = [0, 0], sizes = [8, 64], strides = [1, 1]} : vector<8x256xf32> to vector<8x64xf32>
    %188 = vector.extract_strided_slice %186 {offsets = [0, 64], sizes = [8, 64], strides = [1, 1]} : vector<8x256xf32> to vector<8x64xf32>
    %189 = vector.extract_strided_slice %186 {offsets = [0, 128], sizes = [8, 64], strides = [1, 1]} : vector<8x256xf32> to vector<8x64xf32>
    %190 = vector.extract_strided_slice %186 {offsets = [0, 192], sizes = [8, 64], strides = [1, 1]} : vector<8x256xf32> to vector<8x64xf32>
    %191 = arith.mulf %188, %169 : vector<8x64xf32>
    %192 = arith.mulf %187, %190 : vector<8x64xf32>
    %193 = arith.addf %191, %192 : vector<8x64xf32>
    %194 = math.tanh %193 : vector<8x64xf32>
    %195 = arith.mulf %189, %194 : vector<8x64xf32>
    %196 = vector.extract_strided_slice %195 {offsets = [0, 0], sizes = [8, 32], strides = [1, 1]} : vector<8x64xf32> to vector<8x32xf32>
    %c48_81 = arith.constant 48 : index
    %c0_82 = arith.constant 0 : index
    %197 = vector.load %arg15[%c48_81, %c0_82] : memref<64x64xf32, #tpu.memory_space<vmem>>, vector<8x32xf32>
    tpu.vector_store %arg15[%c48_81, %c0_82], %196 {strides = array<i32>} : memref<64x64xf32, #tpu.memory_space<vmem>>, vector<8x32xf32>,
    %198 = vector.extract_strided_slice %195 {offsets = [0, 32], sizes = [8, 32], strides = [1, 1]} : vector<8x64xf32> to vector<8x32xf32>
    %c8_83 = arith.constant 8 : index
    %c32_84 = arith.constant 32 : index
    %199 = vector.load %arg15[%c8_83, %c32_84] : memref<64x64xf32, #tpu.memory_space<vmem>>, vector<8x32xf32>
    tpu.vector_store %arg15[%c8_83, %c32_84], %198 {strides = array<i32>} : memref<64x64xf32, #tpu.memory_space<vmem>>, vector<8x32xf32>,
    %c56_85 = arith.constant 56 : index
    %c0_86 = arith.constant 0 : index
    %200 = vector.load %arg16[%c56_85, %c0_86] : memref<64x256xf32, #tpu.memory_space<vmem>>, vector<8x256xf32>
    %c0_87 = arith.constant 0 : index
    %c0_88 = arith.constant 0 : index
    %201 = vector.load %arg16[%c0_87, %c0_88] : memref<64x256xf32, #tpu.memory_space<vmem>>, vector<8x256xf32>
    %202 = arith.select %20, %200, %201 : vector<8x256xi1>, vector<8x256xf32>
    %cst_89 = arith.constant dense<0.000000e+00> : vector<8x256xf32>
    %203 = tpu.matmul %195, %29, %cst_89 {dimension_numbers = #tpu.dot_dimension_numbers<[1], [0], [0], [1], [0, 0, 1, 1], [], []>} : vector<8x64xf32>, vector<64x256xf32>, vector<8x256xf32> -> vector<8x256xf32>
    %204 = arith.addf %202, %203 : vector<8x256xf32>
    %205 = math.tanh %204 : vector<8x256xf32>
    %cst_90 = arith.constant 5.000000e-01 : f32
    %206 = vector.broadcast %cst_90 : f32 to vector<8x256xf32>
    %207 = arith.mulf %206, %205 : vector<8x256xf32>
    %cst_91 = arith.constant 5.000000e-01 : f32
    %208 = vector.broadcast %cst_91 : f32 to vector<8x256xf32>
    %209 = arith.addf %207, %208 : vector<8x256xf32>
    %210 = arith.select %2, %209, %205 : vector<8x256xi1>, vector<8x256xf32>
    %211 = vector.extract_strided_slice %210 {offsets = [0, 0], sizes = [8, 64], strides = [1, 1]} : vector<8x256xf32> to vector<8x64xf32>
    %212 = vector.extract_strided_slice %210 {offsets = [0, 64], sizes = [8, 64], strides = [1, 1]} : vector<8x256xf32> to vector<8x64xf32>
    %213 = vector.extract_strided_slice %210 {offsets = [0, 128], sizes = [8, 64], strides = [1, 1]} : vector<8x256xf32> to vector<8x64xf32>
    %214 = vector.extract_strided_slice %210 {offsets = [0, 192], sizes = [8, 64], strides = [1, 1]} : vector<8x256xf32> to vector<8x64xf32>
    %215 = arith.mulf %212, %193 : vector<8x64xf32>
    %216 = arith.mulf %211, %214 : vector<8x64xf32>
    %217 = arith.addf %215, %216 : vector<8x64xf32>
    %218 = math.tanh %217 : vector<8x64xf32>
    %219 = arith.mulf %213, %218 : vector<8x64xf32>
    %220 = vector.extract_strided_slice %219 {offsets = [0, 0], sizes = [8, 32], strides = [1, 1]} : vector<8x64xf32> to vector<8x32xf32>
    %c56_92 = arith.constant 56 : index
    %c0_93 = arith.constant 0 : index
    %221 = vector.load %arg15[%c56_92, %c0_93] : memref<64x64xf32, #tpu.memory_space<vmem>>, vector<8x32xf32>
    tpu.vector_store %arg15[%c56_92, %c0_93], %220 {strides = array<i32>} : memref<64x64xf32, #tpu.memory_space<vmem>>, vector<8x32xf32>,
    %222 = vector.extract_strided_slice %219 {offsets = [0, 32], sizes = [8, 32], strides = [1, 1]} : vector<8x64xf32> to vector<8x32xf32>
    %c0_94 = arith.constant 0 : index
    %c32_95 = arith.constant 32 : index
    %223 = vector.load %arg15[%c0_94, %c32_95] : memref<64x64xf32, #tpu.memory_space<vmem>>, vector<8x32xf32>
    tpu.vector_store %arg15[%c0_94, %c32_95], %222 {strides = array<i32>} : memref<64x64xf32, #tpu.memory_space<vmem>>, vector<8x32xf32>,
    %c0_96 = arith.constant 0 : index
    %c0_97 = arith.constant 0 : index
    %224 = vector.load %arg15[%c0_96, %c0_97] : memref<64x64xf32, #tpu.memory_space<vmem>>, vector<64x64xf32>
    %c0_98 = arith.constant 0 : index
    %c0_99 = arith.constant 0 : index
    %225 = vector.load %arg6[%c0_98, %c0_99] : memref<64x256xf32, #tpu.memory_space<vmem>>, vector<64x256xf32>
    %cst_100 = arith.constant dense<0.000000e+00> : vector<64x256xf32>
    %226 = tpu.matmul %224, %225, %cst_100 {dimension_numbers = #tpu.dot_dimension_numbers<[1], [0], [0], [1], [0, 0, 1, 1], [], []>} : vector<64x64xf32>, vector<64x256xf32>, vector<64x256xf32> -> vector<64x256xf32>
    %c0_101 = arith.constant 0 : index
    %c0_102 = arith.constant 0 : index
    %227 = vector.load %arg8[%c0_101, %c0_102] : memref<1x256xf32, #tpu.memory_space<vmem>>, vector<1x256xf32>
    %228 = vector.broadcast %227 : vector<1x256xf32> to vector<64x256xf32>
    %229 = arith.addf %226, %228 : vector<64x256xf32>
    %c0_103 = arith.constant 0 : index
    %c0_104 = arith.constant 0 : index
    %230 = vector.load %arg16[%c0_103, %c0_104] : memref<64x256xf32, #tpu.memory_space<vmem>>, vector<64x256xf32>
    tpu.vector_store %arg16[%c0_103, %c0_104], %229 {strides = array<i32>} : memref<64x256xf32, #tpu.memory_space<vmem>>, vector<64x256xf32>,
    %c0_105 = arith.constant 0 : index
    %c0_106 = arith.constant 0 : index
    %231 = vector.load %arg7[%c0_105, %c0_106] : memref<64x256xf32, #tpu.memory_space<vmem>>, vector<64x256xf32>
    %cst_107 = arith.constant 0.000000e+00 : f32
    %232 = vector.broadcast %cst_107 : f32 to vector<8x64xf32>
    %cst_108 = arith.constant 0.000000e+00 : f32
    %233 = vector.broadcast %cst_108 : f32 to vector<8x64xf32>
    %c0_109 = arith.constant 0 : index
    %c0_110 = arith.constant 0 : index
    %234 = vector.load %arg16[%c0_109, %c0_110] : memref<64x256xf32, #tpu.memory_space<vmem>>, vector<8x256xf32>
    %c56_111 = arith.constant 56 : index
    %c0_112 = arith.constant 0 : index
    %235 = vector.load %arg16[%c56_111, %c0_112] : memref<64x256xf32, #tpu.memory_space<vmem>>, vector<8x256xf32>
    %236 = arith.select %20, %234, %235 : vector<8x256xi1>, vector<8x256xf32>
    %cst_113 = arith.constant dense<0.000000e+00> : vector<8x256xf32>
    %237 = tpu.matmul %232, %231, %cst_113 {dimension_numbers = #tpu.dot_dimension_numbers<[1], [0], [0], [1], [0, 0, 1, 1], [], []>} : vector<8x64xf32>, vector<64x256xf32>, vector<8x256xf32> -> vector<8x256xf32>
    %238 = arith.addf %236, %237 : vector<8x256xf32>
    %239 = math.tanh %238 : vector<8x256xf32>
    %cst_114 = arith.constant 5.000000e-01 : f32
    %240 = vector.broadcast %cst_114 : f32 to vector<8x256xf32>
    %241 = arith.mulf %240, %239 : vector<8x256xf32>
    %cst_115 = arith.constant 5.000000e-01 : f32
    %242 = vector.broadcast %cst_115 : f32 to vector<8x256xf32>
    %243 = arith.addf %241, %242 : vector<8x256xf32>
    %244 = arith.select %2, %243, %239 : vector<8x256xi1>, vector<8x256xf32>
    %245 = vector.extract_strided_slice %244 {offsets = [0, 0], sizes = [8, 64], strides = [1, 1]} : vector<8x256xf32> to vector<8x64xf32>
    %246 = vector.extract_strided_slice %244 {offsets = [0, 64], sizes = [8, 64], strides = [1, 1]} : vector<8x256xf32> to vector<8x64xf32>
    %247 = vector.extract_strided_slice %244 {offsets = [0, 128], sizes = [8, 64], strides = [1, 1]} : vector<8x256xf32> to vector<8x64xf32>
    %248 = vector.extract_strided_slice %244 {offsets = [0, 192], sizes = [8, 64], strides = [1, 1]} : vector<8x256xf32> to vector<8x64xf32>
    %249 = arith.mulf %246, %233 : vector<8x64xf32>
    %250 = arith.mulf %245, %248 : vector<8x64xf32>
    %251 = arith.addf %249, %250 : vector<8x64xf32>
    %252 = math.tanh %251 : vector<8x64xf32>
    %253 = arith.mulf %247, %252 : vector<8x64xf32>
    %c8_116 = arith.constant 8 : index
    %c0_117 = arith.constant 0 : index
    %254 = vector.load %arg16[%c8_116, %c0_117] : memref<64x256xf32, #tpu.memory_space<vmem>>, vector<8x256xf32>
    %c48_118 = arith.constant 48 : index
    %c0_119 = arith.constant 0 : index
    %255 = vector.load %arg16[%c48_118, %c0_119] : memref<64x256xf32, #tpu.memory_space<vmem>>, vector<8x256xf32>
    %256 = arith.select %20, %254, %255 : vector<8x256xi1>, vector<8x256xf32>
    %cst_120 = arith.constant dense<0.000000e+00> : vector<8x256xf32>
    %257 = tpu.matmul %253, %231, %cst_120 {dimension_numbers = #tpu.dot_dimension_numbers<[1], [0], [0], [1], [0, 0, 1, 1], [], []>} : vector<8x64xf32>, vector<64x256xf32>, vector<8x256xf32> -> vector<8x256xf32>
    %258 = arith.addf %256, %257 : vector<8x256xf32>
    %259 = math.tanh %258 : vector<8x256xf32>
    %cst_121 = arith.constant 5.000000e-01 : f32
    %260 = vector.broadcast %cst_121 : f32 to vector<8x256xf32>
    %261 = arith.mulf %260, %259 : vector<8x256xf32>
    %cst_122 = arith.constant 5.000000e-01 : f32
    %262 = vector.broadcast %cst_122 : f32 to vector<8x256xf32>
    %263 = arith.addf %261, %262 : vector<8x256xf32>
    %264 = arith.select %2, %263, %259 : vector<8x256xi1>, vector<8x256xf32>
    %265 = vector.extract_strided_slice %264 {offsets = [0, 0], sizes = [8, 64], strides = [1, 1]} : vector<8x256xf32> to vector<8x64xf32>
    %266 = vector.extract_strided_slice %264 {offsets = [0, 64], sizes = [8, 64], strides = [1, 1]} : vector<8x256xf32> to vector<8x64xf32>
    %267 = vector.extract_strided_slice %264 {offsets = [0, 128], sizes = [8, 64], strides = [1, 1]} : vector<8x256xf32> to vector<8x64xf32>
    %268 = vector.extract_strided_slice %264 {offsets = [0, 192], sizes = [8, 64], strides = [1, 1]} : vector<8x256xf32> to vector<8x64xf32>
    %269 = arith.mulf %266, %251 : vector<8x64xf32>
    %270 = arith.mulf %265, %268 : vector<8x64xf32>
    %271 = arith.addf %269, %270 : vector<8x64xf32>
    %272 = math.tanh %271 : vector<8x64xf32>
    %273 = arith.mulf %267, %272 : vector<8x64xf32>
    %c16_123 = arith.constant 16 : index
    %c0_124 = arith.constant 0 : index
    %274 = vector.load %arg16[%c16_123, %c0_124] : memref<64x256xf32, #tpu.memory_space<vmem>>, vector<8x256xf32>
    %c40_125 = arith.constant 40 : index
    %c0_126 = arith.constant 0 : index
    %275 = vector.load %arg16[%c40_125, %c0_126] : memref<64x256xf32, #tpu.memory_space<vmem>>, vector<8x256xf32>
    %276 = arith.select %20, %274, %275 : vector<8x256xi1>, vector<8x256xf32>
    %cst_127 = arith.constant dense<0.000000e+00> : vector<8x256xf32>
    %277 = tpu.matmul %273, %231, %cst_127 {dimension_numbers = #tpu.dot_dimension_numbers<[1], [0], [0], [1], [0, 0, 1, 1], [], []>} : vector<8x64xf32>, vector<64x256xf32>, vector<8x256xf32> -> vector<8x256xf32>
    %278 = arith.addf %276, %277 : vector<8x256xf32>
    %279 = math.tanh %278 : vector<8x256xf32>
    %cst_128 = arith.constant 5.000000e-01 : f32
    %280 = vector.broadcast %cst_128 : f32 to vector<8x256xf32>
    %281 = arith.mulf %280, %279 : vector<8x256xf32>
    %cst_129 = arith.constant 5.000000e-01 : f32
    %282 = vector.broadcast %cst_129 : f32 to vector<8x256xf32>
    %283 = arith.addf %281, %282 : vector<8x256xf32>
    %284 = arith.select %2, %283, %279 : vector<8x256xi1>, vector<8x256xf32>
    %285 = vector.extract_strided_slice %284 {offsets = [0, 0], sizes = [8, 64], strides = [1, 1]} : vector<8x256xf32> to vector<8x64xf32>
    %286 = vector.extract_strided_slice %284 {offsets = [0, 64], sizes = [8, 64], strides = [1, 1]} : vector<8x256xf32> to vector<8x64xf32>
    %287 = vector.extract_strided_slice %284 {offsets = [0, 128], sizes = [8, 64], strides = [1, 1]} : vector<8x256xf32> to vector<8x64xf32>
    %288 = vector.extract_strided_slice %284 {offsets = [0, 192], sizes = [8, 64], strides = [1, 1]} : vector<8x256xf32> to vector<8x64xf32>
    %289 = arith.mulf %286, %271 : vector<8x64xf32>
    %290 = arith.mulf %285, %288 : vector<8x64xf32>
    %291 = arith.addf %289, %290 : vector<8x64xf32>
    %292 = math.tanh %291 : vector<8x64xf32>
    %293 = arith.mulf %287, %292 : vector<8x64xf32>
    %c24_130 = arith.constant 24 : index
    %c0_131 = arith.constant 0 : index
    %294 = vector.load %arg16[%c24_130, %c0_131] : memref<64x256xf32, #tpu.memory_space<vmem>>, vector<8x256xf32>
    %c32_132 = arith.constant 32 : index
    %c0_133 = arith.constant 0 : index
    %295 = vector.load %arg16[%c32_132, %c0_133] : memref<64x256xf32, #tpu.memory_space<vmem>>, vector<8x256xf32>
    %296 = arith.select %20, %294, %295 : vector<8x256xi1>, vector<8x256xf32>
    %cst_134 = arith.constant dense<0.000000e+00> : vector<8x256xf32>
    %297 = tpu.matmul %293, %231, %cst_134 {dimension_numbers = #tpu.dot_dimension_numbers<[1], [0], [0], [1], [0, 0, 1, 1], [], []>} : vector<8x64xf32>, vector<64x256xf32>, vector<8x256xf32> -> vector<8x256xf32>
    %298 = arith.addf %296, %297 : vector<8x256xf32>
    %299 = math.tanh %298 : vector<8x256xf32>
    %cst_135 = arith.constant 5.000000e-01 : f32
    %300 = vector.broadcast %cst_135 : f32 to vector<8x256xf32>
    %301 = arith.mulf %300, %299 : vector<8x256xf32>
    %cst_136 = arith.constant 5.000000e-01 : f32
    %302 = vector.broadcast %cst_136 : f32 to vector<8x256xf32>
    %303 = arith.addf %301, %302 : vector<8x256xf32>
    %304 = arith.select %2, %303, %299 : vector<8x256xi1>, vector<8x256xf32>
    %305 = vector.extract_strided_slice %304 {offsets = [0, 0], sizes = [8, 64], strides = [1, 1]} : vector<8x256xf32> to vector<8x64xf32>
    %306 = vector.extract_strided_slice %304 {offsets = [0, 64], sizes = [8, 64], strides = [1, 1]} : vector<8x256xf32> to vector<8x64xf32>
    %307 = vector.extract_strided_slice %304 {offsets = [0, 128], sizes = [8, 64], strides = [1, 1]} : vector<8x256xf32> to vector<8x64xf32>
    %308 = vector.extract_strided_slice %304 {offsets = [0, 192], sizes = [8, 64], strides = [1, 1]} : vector<8x256xf32> to vector<8x64xf32>
    %309 = arith.mulf %306, %291 : vector<8x64xf32>
    %310 = arith.mulf %305, %308 : vector<8x64xf32>
    %311 = arith.addf %309, %310 : vector<8x64xf32>
    %312 = math.tanh %311 : vector<8x64xf32>
    %313 = arith.mulf %307, %312 : vector<8x64xf32>
    %c32_137 = arith.constant 32 : index
    %c0_138 = arith.constant 0 : index
    %314 = vector.load %arg16[%c32_137, %c0_138] : memref<64x256xf32, #tpu.memory_space<vmem>>, vector<8x256xf32>
    %c24_139 = arith.constant 24 : index
    %c0_140 = arith.constant 0 : index
    %315 = vector.load %arg16[%c24_139, %c0_140] : memref<64x256xf32, #tpu.memory_space<vmem>>, vector<8x256xf32>
    %316 = arith.select %20, %314, %315 : vector<8x256xi1>, vector<8x256xf32>
    %cst_141 = arith.constant dense<0.000000e+00> : vector<8x256xf32>
    %317 = tpu.matmul %313, %231, %cst_141 {dimension_numbers = #tpu.dot_dimension_numbers<[1], [0], [0], [1], [0, 0, 1, 1], [], []>} : vector<8x64xf32>, vector<64x256xf32>, vector<8x256xf32> -> vector<8x256xf32>
    %318 = arith.addf %316, %317 : vector<8x256xf32>
    %319 = math.tanh %318 : vector<8x256xf32>
    %cst_142 = arith.constant 5.000000e-01 : f32
    %320 = vector.broadcast %cst_142 : f32 to vector<8x256xf32>
    %321 = arith.mulf %320, %319 : vector<8x256xf32>
    %cst_143 = arith.constant 5.000000e-01 : f32
    %322 = vector.broadcast %cst_143 : f32 to vector<8x256xf32>
    %323 = arith.addf %321, %322 : vector<8x256xf32>
    %324 = arith.select %2, %323, %319 : vector<8x256xi1>, vector<8x256xf32>
    %325 = vector.extract_strided_slice %324 {offsets = [0, 0], sizes = [8, 64], strides = [1, 1]} : vector<8x256xf32> to vector<8x64xf32>
    %326 = vector.extract_strided_slice %324 {offsets = [0, 64], sizes = [8, 64], strides = [1, 1]} : vector<8x256xf32> to vector<8x64xf32>
    %327 = vector.extract_strided_slice %324 {offsets = [0, 128], sizes = [8, 64], strides = [1, 1]} : vector<8x256xf32> to vector<8x64xf32>
    %328 = vector.extract_strided_slice %324 {offsets = [0, 192], sizes = [8, 64], strides = [1, 1]} : vector<8x256xf32> to vector<8x64xf32>
    %329 = arith.mulf %326, %311 : vector<8x64xf32>
    %330 = arith.mulf %325, %328 : vector<8x64xf32>
    %331 = arith.addf %329, %330 : vector<8x64xf32>
    %332 = math.tanh %331 : vector<8x64xf32>
    %333 = arith.mulf %327, %332 : vector<8x64xf32>
    %c40_144 = arith.constant 40 : index
    %c0_145 = arith.constant 0 : index
    %334 = vector.load %arg16[%c40_144, %c0_145] : memref<64x256xf32, #tpu.memory_space<vmem>>, vector<8x256xf32>
    %c16_146 = arith.constant 16 : index
    %c0_147 = arith.constant 0 : index
    %335 = vector.load %arg16[%c16_146, %c0_147] : memref<64x256xf32, #tpu.memory_space<vmem>>, vector<8x256xf32>
    %336 = arith.select %20, %334, %335 : vector<8x256xi1>, vector<8x256xf32>
    %cst_148 = arith.constant dense<0.000000e+00> : vector<8x256xf32>
    %337 = tpu.matmul %333, %231, %cst_148 {dimension_numbers = #tpu.dot_dimension_numbers<[1], [0], [0], [1], [0, 0, 1, 1], [], []>} : vector<8x64xf32>, vector<64x256xf32>, vector<8x256xf32> -> vector<8x256xf32>
    %338 = arith.addf %336, %337 : vector<8x256xf32>
    %339 = math.tanh %338 : vector<8x256xf32>
    %cst_149 = arith.constant 5.000000e-01 : f32
    %340 = vector.broadcast %cst_149 : f32 to vector<8x256xf32>
    %341 = arith.mulf %340, %339 : vector<8x256xf32>
    %cst_150 = arith.constant 5.000000e-01 : f32
    %342 = vector.broadcast %cst_150 : f32 to vector<8x256xf32>
    %343 = arith.addf %341, %342 : vector<8x256xf32>
    %344 = arith.select %2, %343, %339 : vector<8x256xi1>, vector<8x256xf32>
    %345 = vector.extract_strided_slice %344 {offsets = [0, 0], sizes = [8, 64], strides = [1, 1]} : vector<8x256xf32> to vector<8x64xf32>
    %346 = vector.extract_strided_slice %344 {offsets = [0, 64], sizes = [8, 64], strides = [1, 1]} : vector<8x256xf32> to vector<8x64xf32>
    %347 = vector.extract_strided_slice %344 {offsets = [0, 128], sizes = [8, 64], strides = [1, 1]} : vector<8x256xf32> to vector<8x64xf32>
    %348 = vector.extract_strided_slice %344 {offsets = [0, 192], sizes = [8, 64], strides = [1, 1]} : vector<8x256xf32> to vector<8x64xf32>
    %349 = arith.mulf %346, %331 : vector<8x64xf32>
    %350 = arith.mulf %345, %348 : vector<8x64xf32>
    %351 = arith.addf %349, %350 : vector<8x64xf32>
    %352 = math.tanh %351 : vector<8x64xf32>
    %353 = arith.mulf %347, %352 : vector<8x64xf32>
    %c48_151 = arith.constant 48 : index
    %c0_152 = arith.constant 0 : index
    %354 = vector.load %arg16[%c48_151, %c0_152] : memref<64x256xf32, #tpu.memory_space<vmem>>, vector<8x256xf32>
    %c8_153 = arith.constant 8 : index
    %c0_154 = arith.constant 0 : index
    %355 = vector.load %arg16[%c8_153, %c0_154] : memref<64x256xf32, #tpu.memory_space<vmem>>, vector<8x256xf32>
    %356 = arith.select %20, %354, %355 : vector<8x256xi1>, vector<8x256xf32>
    %cst_155 = arith.constant dense<0.000000e+00> : vector<8x256xf32>
    %357 = tpu.matmul %353, %231, %cst_155 {dimension_numbers = #tpu.dot_dimension_numbers<[1], [0], [0], [1], [0, 0, 1, 1], [], []>} : vector<8x64xf32>, vector<64x256xf32>, vector<8x256xf32> -> vector<8x256xf32>
    %358 = arith.addf %356, %357 : vector<8x256xf32>
    %359 = math.tanh %358 : vector<8x256xf32>
    %cst_156 = arith.constant 5.000000e-01 : f32
    %360 = vector.broadcast %cst_156 : f32 to vector<8x256xf32>
    %361 = arith.mulf %360, %359 : vector<8x256xf32>
    %cst_157 = arith.constant 5.000000e-01 : f32
    %362 = vector.broadcast %cst_157 : f32 to vector<8x256xf32>
    %363 = arith.addf %361, %362 : vector<8x256xf32>
    %364 = arith.select %2, %363, %359 : vector<8x256xi1>, vector<8x256xf32>
    %365 = vector.extract_strided_slice %364 {offsets = [0, 0], sizes = [8, 64], strides = [1, 1]} : vector<8x256xf32> to vector<8x64xf32>
    %366 = vector.extract_strided_slice %364 {offsets = [0, 64], sizes = [8, 64], strides = [1, 1]} : vector<8x256xf32> to vector<8x64xf32>
    %367 = vector.extract_strided_slice %364 {offsets = [0, 128], sizes = [8, 64], strides = [1, 1]} : vector<8x256xf32> to vector<8x64xf32>
    %368 = vector.extract_strided_slice %364 {offsets = [0, 192], sizes = [8, 64], strides = [1, 1]} : vector<8x256xf32> to vector<8x64xf32>
    %369 = arith.mulf %366, %351 : vector<8x64xf32>
    %370 = arith.mulf %365, %368 : vector<8x64xf32>
    %371 = arith.addf %369, %370 : vector<8x64xf32>
    %372 = math.tanh %371 : vector<8x64xf32>
    %373 = arith.mulf %367, %372 : vector<8x64xf32>
    %c56_158 = arith.constant 56 : index
    %c0_159 = arith.constant 0 : index
    %374 = vector.load %arg16[%c56_158, %c0_159] : memref<64x256xf32, #tpu.memory_space<vmem>>, vector<8x256xf32>
    %c0_160 = arith.constant 0 : index
    %c0_161 = arith.constant 0 : index
    %375 = vector.load %arg16[%c0_160, %c0_161] : memref<64x256xf32, #tpu.memory_space<vmem>>, vector<8x256xf32>
    %376 = arith.select %20, %374, %375 : vector<8x256xi1>, vector<8x256xf32>
    %cst_162 = arith.constant dense<0.000000e+00> : vector<8x256xf32>
    %377 = tpu.matmul %373, %231, %cst_162 {dimension_numbers = #tpu.dot_dimension_numbers<[1], [0], [0], [1], [0, 0, 1, 1], [], []>} : vector<8x64xf32>, vector<64x256xf32>, vector<8x256xf32> -> vector<8x256xf32>
    %378 = arith.addf %376, %377 : vector<8x256xf32>
    %379 = math.tanh %378 : vector<8x256xf32>
    %cst_163 = arith.constant 5.000000e-01 : f32
    %380 = vector.broadcast %cst_163 : f32 to vector<8x256xf32>
    %381 = arith.mulf %380, %379 : vector<8x256xf32>
    %cst_164 = arith.constant 5.000000e-01 : f32
    %382 = vector.broadcast %cst_164 : f32 to vector<8x256xf32>
    %383 = arith.addf %381, %382 : vector<8x256xf32>
    %384 = arith.select %2, %383, %379 : vector<8x256xi1>, vector<8x256xf32>
    %385 = vector.extract_strided_slice %384 {offsets = [0, 0], sizes = [8, 64], strides = [1, 1]} : vector<8x256xf32> to vector<8x64xf32>
    %386 = vector.extract_strided_slice %384 {offsets = [0, 64], sizes = [8, 64], strides = [1, 1]} : vector<8x256xf32> to vector<8x64xf32>
    %387 = vector.extract_strided_slice %384 {offsets = [0, 128], sizes = [8, 64], strides = [1, 1]} : vector<8x256xf32> to vector<8x64xf32>
    %388 = vector.extract_strided_slice %384 {offsets = [0, 192], sizes = [8, 64], strides = [1, 1]} : vector<8x256xf32> to vector<8x64xf32>
    %389 = arith.mulf %386, %371 : vector<8x64xf32>
    %390 = arith.mulf %385, %388 : vector<8x64xf32>
    %391 = arith.addf %389, %390 : vector<8x64xf32>
    %392 = math.tanh %391 : vector<8x64xf32>
    %393 = arith.mulf %387, %392 : vector<8x64xf32>
    %c0_165 = arith.constant 0 : index
    %c0_166 = arith.constant 0 : index
    %394 = vector.load %arg9[%c0_165, %c0_166] : memref<64x64xf32, #tpu.memory_space<vmem>>, vector<64x64xf32>
    %cst_167 = arith.constant dense<0.000000e+00> : vector<8x64xf32>
    %395 = tpu.matmul %393, %394, %cst_167 {dimension_numbers = #tpu.dot_dimension_numbers<[1], [0], [0], [1], [0, 0, 1, 1], [], []>} : vector<8x64xf32>, vector<64x64xf32>, vector<8x64xf32> -> vector<8x64xf32>
    %c0_168 = arith.constant 0 : index
    %c0_169 = arith.constant 0 : index
    %c0_170 = arith.constant 0 : index
    %396 = vector.load %arg2[%c0_168, %c0_169, %c0_170] : memref<1x8x8xf32, #tpu.memory_space<vmem>>, vector<1x8x8xf32>
    %397 = vector.shape_cast %396 : vector<1x8x8xf32> to vector<8x8xf32>
    %c0_171 = arith.constant 0 : index
    %c0_172 = arith.constant 0 : index
    %398 = vector.load %arg10[%c0_171, %c0_172] : memref<8x64xf32, #tpu.memory_space<vmem>>, vector<8x64xf32>
    %cst_173 = arith.constant dense<0.000000e+00> : vector<8x64xf32>
    %399 = tpu.matmul %397, %398, %cst_173 {dimension_numbers = #tpu.dot_dimension_numbers<[1], [0], [0], [1], [0, 0, 1, 1], [], []>} : vector<8x8xf32>, vector<8x64xf32>, vector<8x64xf32> -> vector<8x64xf32>
    %400 = arith.addf %395, %399 : vector<8x64xf32>
    %c0_174 = arith.constant 0 : index
    %c0_175 = arith.constant 0 : index
    %401 = vector.load %arg11[%c0_174, %c0_175] : memref<1x64xf32, #tpu.memory_space<vmem>>, vector<1x64xf32>
    %402 = vector.broadcast %401 : vector<1x64xf32> to vector<8x64xf32>
    %403 = arith.addf %400, %402 : vector<8x64xf32>
    %cst_176 = arith.constant 0.000000e+00 : f32
    %404 = vector.broadcast %cst_176 : f32 to vector<8x64xf32>
    %405 = arith.maximumf %403, %404 : vector<8x64xf32>
    %c0_177 = arith.constant 0 : index
    %c0_178 = arith.constant 0 : index
    %406 = vector.load %arg12[%c0_177, %c0_178] : memref<64x128xf32, #tpu.memory_space<vmem>>, vector<64x128xf32>
    %cst_179 = arith.constant dense<0.000000e+00> : vector<8x128xf32>
    %407 = tpu.matmul %405, %406, %cst_179 {dimension_numbers = #tpu.dot_dimension_numbers<[1], [0], [0], [1], [0, 0, 1, 1], [], []>} : vector<8x64xf32>, vector<64x128xf32>, vector<8x128xf32> -> vector<8x128xf32>
    %c0_180 = arith.constant 0 : index
    %c0_181 = arith.constant 0 : index
    %408 = vector.load %arg13[%c0_180, %c0_181] : memref<1x128xf32, #tpu.memory_space<vmem>>, vector<1x128xf32>
    %409 = vector.broadcast %408 : vector<1x128xf32> to vector<8x128xf32>
    %410 = arith.addf %407, %409 : vector<8x128xf32>
    %c0_182 = arith.constant 0 : index
    %c0_183 = arith.constant 0 : index
    %c0_184 = arith.constant 0 : index
    %411 = vector.load %arg14[%c0_182, %c0_183, %c0_184] : memref<1x8x128xf32, #tpu.memory_space<vmem>>, vector<1x8x128xf32>
    %412 = vector.shape_cast %411 : vector<1x8x128xf32> to vector<8x128xf32>
    %413 = vector.shape_cast %410 : vector<8x128xf32> to vector<1x8x128xf32>
    tpu.vector_store %arg14[%c0_182, %c0_183, %c0_184], %413 {strides = array<i32>} : memref<1x8x128xf32, #tpu.memory_space<vmem>>, vector<1x8x128xf32>,
    return
  }
  func.func @transform_0(%arg0: i32) -> (i32, i32, i32) {
    %c0_i32 = arith.constant 0 : i32
    %c0_i32_0 = arith.constant 0 : i32
    %c0_i32_1 = arith.constant 0 : i32
    return %arg0, %c0_i32, %c0_i32_0 : i32, i32, i32
  }
  func.func @transform_1(%arg0: i32) -> (i32, i32, i32) {
    %c0_i32 = arith.constant 0 : i32
    %c0_i32_0 = arith.constant 0 : i32
    %c0_i32_1 = arith.constant 0 : i32
    return %arg0, %c0_i32, %c0_i32_0 : i32, i32, i32
  }
  func.func @transform_2(%arg0: i32) -> (i32, i32) {
    %c0_i32 = arith.constant 0 : i32
    %c0_i32_0 = arith.constant 0 : i32
    %c0_i32_1 = arith.constant 0 : i32
    return %c0_i32, %c0_i32_0 : i32, i32
  }
  func.func @transform_3(%arg0: i32) -> (i32, i32) {
    %c0_i32 = arith.constant 0 : i32
    %c0_i32_0 = arith.constant 0 : i32
    %c0_i32_1 = arith.constant 0 : i32
    return %c0_i32, %c0_i32_0 : i32, i32
  }
  func.func @transform_4(%arg0: i32) -> (i32, i32) {
    %c0_i32 = arith.constant 0 : i32
    %c0_i32_0 = arith.constant 0 : i32
    %c0_i32_1 = arith.constant 0 : i32
    return %c0_i32, %c0_i32_0 : i32, i32
  }
  func.func @transform_5(%arg0: i32) -> (i32, i32) {
    %c0_i32 = arith.constant 0 : i32
    %c0_i32_0 = arith.constant 0 : i32
    %c0_i32_1 = arith.constant 0 : i32
    return %c0_i32, %c0_i32_0 : i32, i32
  }
  func.func @transform_6(%arg0: i32) -> (i32, i32) {
    %c0_i32 = arith.constant 0 : i32
    %c0_i32_0 = arith.constant 0 : i32
    %c0_i32_1 = arith.constant 0 : i32
    return %c0_i32, %c0_i32_0 : i32, i32
  }
  func.func @transform_7(%arg0: i32) -> (i32, i32) {
    %c0_i32 = arith.constant 0 : i32
    %c0_i32_0 = arith.constant 0 : i32
    %c0_i32_1 = arith.constant 0 : i32
    return %c0_i32, %c0_i32_0 : i32, i32
  }
  func.func @transform_8(%arg0: i32) -> (i32, i32) {
    %c0_i32 = arith.constant 0 : i32
    %c0_i32_0 = arith.constant 0 : i32
    %c0_i32_1 = arith.constant 0 : i32
    return %c0_i32, %c0_i32_0 : i32, i32
  }
  func.func @transform_9(%arg0: i32) -> (i32, i32) {
    %c0_i32 = arith.constant 0 : i32
    %c0_i32_0 = arith.constant 0 : i32
    %c0_i32_1 = arith.constant 0 : i32
    return %c0_i32, %c0_i32_0 : i32, i32
  }
  func.func @transform_10(%arg0: i32) -> (i32, i32) {
    %c0_i32 = arith.constant 0 : i32
    %c0_i32_0 = arith.constant 0 : i32
    %c0_i32_1 = arith.constant 0 : i32
    return %c0_i32, %c0_i32_0 : i32, i32
  }
  func.func @transform_11(%arg0: i32) -> (i32, i32) {
    %c0_i32 = arith.constant 0 : i32
    %c0_i32_0 = arith.constant 0 : i32
    %c0_i32_1 = arith.constant 0 : i32
    return %c0_i32, %c0_i32_0 : i32, i32
  }
  func.func @transform_12(%arg0: i32) -> (i32, i32) {
    %c0_i32 = arith.constant 0 : i32
    %c0_i32_0 = arith.constant 0 : i32
    %c0_i32_1 = arith.constant 0 : i32
    return %c0_i32, %c0_i32_0 : i32, i32
  }
  func.func @transform_13(%arg0: i32) -> (i32, i32, i32) {
    %c0_i32 = arith.constant 0 : i32
    %c0_i32_0 = arith.constant 0 : i32
    %c0_i32_1 = arith.constant 0 : i32
    return %arg0, %c0_i32, %c0_i32_0 : i32, i32, i32
  }
}

</mosaic_0001>

<llo_original>
// kernel: generator_cgan_forward.1
$region0: #{generator_cgan_forward.1}
  #allocation0 [shape = 'u32[]', space=smem, size = 0x4, offset = 0x4, fixed_abs, tag = 'smem constant byte address 0x4 - core index']
  #allocation1 [shape = 'u32[72,128]{1,0:T(1,128)}', space=vmem, size = 0x9000, scoped, tag = 'internal scratch']
  #allocation2 [shape = 'f32[64,64]{1,0:T(8,128)}', space=vmem, size = 0x8000, scoped, tag = 'scratch operand']
  #allocation3 [shape = 'f32[64,256]{1,0:T(8,128)}', space=vmem, size = 0x10000, scoped, tag = 'scratch operand']
  %s0 = inlined_call_operand.vmem [shape: f32[1,64,4], index: 0, kind: input, shape index: {}]
  %s1 = inlined_call_operand.vmem [shape: f32[1,8,8], index: 1, kind: input, shape index: {}]
  %s2 = inlined_call_operand.vmem [shape: f32[4,256], index: 2, kind: input, shape index: {}]
  %s3 = inlined_call_operand.vmem [shape: f32[64,256], index: 3, kind: input, shape index: {}]
  %s4 = inlined_call_operand.vmem [shape: f32[1,256], index: 4, kind: input, shape index: {}]
  %s5 = inlined_call_operand.hbm [shape: f32[64,256], index: 5, kind: input, shape index: {}]
  %s6 = inlined_call_operand.hbm [shape: f32[64,256], index: 6, kind: input, shape index: {}]
  %s7 = inlined_call_operand.vmem [shape: f32[1,256], index: 7, kind: input, shape index: {}]
  %s8 = inlined_call_operand.hbm [shape: f32[64,64], index: 8, kind: input, shape index: {}]
  %s9 = inlined_call_operand.vmem [shape: f32[8,64], index: 9, kind: input, shape index: {}]
  %s10 = inlined_call_operand.hbm [shape: f32[1,64], index: 10, kind: input, shape index: {}]
  %s11 = inlined_call_operand.hbm [shape: f32[64,128], index: 11, kind: input, shape index: {}]
  %s12 = inlined_call_operand.hbm [shape: f32[1,128], index: 12, kind: input, shape index: {}]
  %s13 = inlined_call_operand.vmem [shape: f32[1,8,128], index: 13, kind: output, shape index: {}]
  %s14 = sld [smem:[#allocation0]]
  $region86: #{generator_cgan_forward.1} parent=0
    _
  %s16 = ssub.s32 1, %s14
  %s17 = scalar_select 0, %s16, %s14
  $region1: #{generator_cgan_forward.1} parent=0
    #allocation4 [shape = 'u8[65536]{0}', space=vmem, size = 0x10000, scoped, tag = 'input window, operand 5, single buffered']
    #allocation5 [shape = 's32[1]{0}', space=sflag, size = 0x4, scoped, tag = 'scoped memory for generator_cgan_forward.1']
    #allocation6 [shape = 'u8[65536]{0}', space=vmem, size = 0x10000, scoped, tag = 'input window, operand 6, single buffered']
    #allocation7 [shape = 's32[1]{0}', space=sflag, size = 0x4, scoped, tag = 'scoped memory for generator_cgan_forward.1']
    #allocation8 [shape = 'u8[32768]{0}', space=vmem, size = 0x8000, scoped, tag = 'input window, operand 8, single buffered']
    #allocation9 [shape = 'u8[512]{0}', space=vmem, size = 0x400, scoped, tag = 'input window, operand 10, single buffered']
    #allocation10 [shape = 's32[1]{0}', space=sflag, size = 0x4, scoped, tag = 'scoped memory for generator_cgan_forward.1']
    #allocation11 [shape = 'u8[32768]{0}', space=vmem, size = 0x8000, scoped, tag = 'input window, operand 11, single buffered']
    #allocation12 [shape = 'u8[512]{0}', space=vmem, size = 0x400, scoped, tag = 'input window, operand 12, single buffered']
    #allocation13 [shape = 's32[1]{0}', space=sflag, size = 0x4, scoped, tag = 'scoped memory for generator_cgan_forward.1']
    %18 = vsyncpa [#allocation5], 0
    %19 = vsyncpa [#allocation7], 0
    %20 = vsyncpa [#allocation10], 0
    %21 = vsyncpa [#allocation13], 0
    // Predicated region
    $region2: #{generator_cgan_forward.1} parent=1 // pred_check
      _
    $region3: #{generator_cgan_forward.1} parent=1 // pred_check_branch
      %23 = sbr.rel (0) target = $region5
    $region4: #{generator_cgan_forward.1} parent=1 // pred_region
      _
    $region5: #{generator_cgan_forward.1} parent=1 // pred_fallthru
      _
    // Predicated region
    $region6: #{generator_cgan_forward.1} parent=1 // pred_check
      _
    $region7: #{generator_cgan_forward.1} parent=1 // pred_check_branch
      %25 = sbr.rel (0) target = $region9
    $region8: #{generator_cgan_forward.1} parent=1 // pred_region
      _
    $region9: #{generator_cgan_forward.1} parent=1 // pred_fallthru
      _
    // Predicated region
    $region10: #{generator_cgan_forward.1} parent=1 // pred_check
      _
    $region11: #{generator_cgan_forward.1} parent=1 // pred_check_branch
      %27 = sbr.rel (0) target = $region13
    $region12: #{generator_cgan_forward.1} parent=1 // pred_region
      _
    $region13: #{generator_cgan_forward.1} parent=1 // pred_fallthru
      _
    // Predicated region
    $region14: #{generator_cgan_forward.1} parent=1 // pred_check
      _
    $region15: #{generator_cgan_forward.1} parent=1 // pred_check_branch
      %29 = sbr.rel (0) target = $region17
    $region16: #{generator_cgan_forward.1} parent=1 // pred_region
      _
    $region17: #{generator_cgan_forward.1} parent=1 // pred_fallthru
      _
    // Predicated region
    $region18: #{generator_cgan_forward.1} parent=1 // pred_check
      _
    $region19: #{generator_cgan_forward.1} parent=1 // pred_check_branch
      %31 = sbr.rel (0) target = $region21
    $region20: #{generator_cgan_forward.1} parent=1 // pred_region
      _
    $region21: #{generator_cgan_forward.1} parent=1 // pred_fallthru
      _
    // Predicated region
    $region22: #{generator_cgan_forward.1} parent=1 // pred_check
      _
    $region23: #{generator_cgan_forward.1} parent=1 // pred_check_branch
      %33 = sbr.rel (0) target = $region25
    $region24: #{generator_cgan_forward.1} parent=1 // pred_region
      %35 = vsyncadd [#allocation5], 0
      %s36 = sshll.u32 %s5, 4
      %s37 = int_to_ptr.hbm [resolvable:$true] %s36
      %s38 = sshll.u32 [#allocation4], 4
      %s39 = int_to_ptr.vmem [resolvable:$true] %s38
      %44 = dma.hbm_to_vmem [thread:$0]  %s37, 2048, %s39, [#allocation5], 256, 256, 16
    $region25: #{generator_cgan_forward.1} parent=1 // pred_fallthru
      _
    // Predicated region
    $region26: #{generator_cgan_forward.1} parent=1 // pred_check
      _
    $region27: #{generator_cgan_forward.1} parent=1 // pred_check_branch
      %46 = sbr.rel (0) target = $region29
    $region28: #{generator_cgan_forward.1} parent=1 // pred_region
      %48 = vsyncadd [#allocation7], 0
      %s49 = sshll.u32 %s6, 4
      %s50 = int_to_ptr.hbm [resolvable:$true] %s49
      %s51 = sshll.u32 [#allocation6], 4
      %s52 = int_to_ptr.vmem [resolvable:$true] %s51
      %57 = dma.hbm_to_vmem [thread:$0]  %s50, 2048, %s52, [#allocation7], 256, 256, 16
    $region29: #{generator_cgan_forward.1} parent=1 // pred_fallthru
      _
    // Predicated region
    $region30: #{generator_cgan_forward.1} parent=1 // pred_check
      _
    $region31: #{generator_cgan_forward.1} parent=1 // pred_check_branch
      %59 = sbr.rel (0) target = $region33
    $region32: #{generator_cgan_forward.1} parent=1 // pred_region
      _
    $region33: #{generator_cgan_forward.1} parent=1 // pred_fallthru
      _
    // Predicated region
    $region34: #{generator_cgan_forward.1} parent=1 // pred_check
      _
    $region35: #{generator_cgan_forward.1} parent=1 // pred_check_branch
      %61 = sbr.rel (0) target = $region37
    $region36: #{generator_cgan_forward.1} parent=1 // pred_region
      %63 = vsyncadd [#allocation7], 0
      %s64 = sshll.u32 %s8, 4
      %s65 = int_to_ptr.hbm [resolvable:$true] %s64
      %s66 = sshll.u32 [#allocation8], 4
      %s67 = int_to_ptr.vmem [resolvable:$true] %s66
      %72 = dma.hbm_to_vmem [thread:$0]  %s65, 1024, %s67, [#allocation7], 128, 128, 8
    $region37: #{generator_cgan_forward.1} parent=1 // pred_fallthru
      _
    // Predicated region
    $region38: #{generator_cgan_forward.1} parent=1 // pred_check
      _
    $region39: #{generator_cgan_forward.1} parent=1 // pred_check_branch
      %74 = sbr.rel (0) target = $region41
    $region40: #{generator_cgan_forward.1} parent=1 // pred_region
      _
    $region41: #{generator_cgan_forward.1} parent=1 // pred_fallthru
      _
    // Predicated region
    $region42: #{generator_cgan_forward.1} parent=1 // pred_check
      _
    $region43: #{generator_cgan_forward.1} parent=1 // pred_check_branch
      %76 = sbr.rel (0) target = $region45
    $region44: #{generator_cgan_forward.1} parent=1 // pred_region
      %78 = vsyncadd [#allocation10], 0
      %s80 = sshll.u32 %s10, 4
      %s81 = int_to_ptr.hbm [resolvable:$true] %s80
      %s82 = sshll.u32 [#allocation9], 4
      %s83 = int_to_ptr.vmem [resolvable:$true] %s82
      %85 = dma.hbm_to_vmem [thread:$0]  %s81, 16, %s83, [#allocation10]
    $region45: #{generator_cgan_forward.1} parent=1 // pred_fallthru
      _
    // Predicated region
    $region46: #{generator_cgan_forward.1} parent=1 // pred_check
      _
    $region47: #{generator_cgan_forward.1} parent=1 // pred_check_branch
      %87 = sbr.rel (0) target = $region49
    $region48: #{generator_cgan_forward.1} parent=1 // pred_region
      %89 = vsyncadd [#allocation10], 0
      %s90 = sshll.u32 %s11, 4
      %s91 = int_to_ptr.hbm [resolvable:$true] %s90
      %s92 = sshll.u32 [#allocation11], 4
      %s93 = int_to_ptr.vmem [resolvable:$true] %s92
      %98 = dma.hbm_to_vmem [thread:$0]  %s91, 1024, %s93, [#allocation10], 128, 128, 8
    $region49: #{generator_cgan_forward.1} parent=1 // pred_fallthru
      _
    // Predicated region
    $region50: #{generator_cgan_forward.1} parent=1 // pred_check
      _
    $region51: #{generator_cgan_forward.1} parent=1 // pred_check_branch
      %100 = sbr.rel (0) target = $region53
    $region52: #{generator_cgan_forward.1} parent=1 // pred_region
      %102 = vsyncadd [#allocation13], 0
      %s104 = sshll.u32 %s12, 4
      %s105 = int_to_ptr.hbm [resolvable:$true] %s104
      %s106 = sshll.u32 [#allocation12], 4
      %s107 = int_to_ptr.vmem [resolvable:$true] %s106
      %109 = dma.hbm_to_vmem [thread:$0]  %s105, 16, %s107, [#allocation13]
    $region53: #{generator_cgan_forward.1} parent=1 // pred_fallthru
      _
    // Predicated region
    $region54: #{generator_cgan_forward.1} parent=1 // pred_check
      _
    $region55: #{generator_cgan_forward.1} parent=1 // pred_check_branch
      %111 = sbr.rel (0) target = $region57
    $region56: #{generator_cgan_forward.1} parent=1 // pred_region
      %113 = dma.done [#allocation5], 2048
    $region57: #{generator_cgan_forward.1} parent=1 // pred_fallthru
      _
    // Predicated region
    $region58: #{generator_cgan_forward.1} parent=1 // pred_check
      _
    $region59: #{generator_cgan_forward.1} parent=1 // pred_check_branch
      %115 = sbr.rel (0) target = $region61
    $region60: #{generator_cgan_forward.1} parent=1 // pred_region
      %117 = dma.done [#allocation7], 2048
    $region61: #{generator_cgan_forward.1} parent=1 // pred_fallthru
      _
    // Predicated region
    $region62: #{generator_cgan_forward.1} parent=1 // pred_check
      _
    $region63: #{generator_cgan_forward.1} parent=1 // pred_check_branch
      %119 = sbr.rel (0) target = $region65
    $region64: #{generator_cgan_forward.1} parent=1 // pred_region
      %121 = dma.done [#allocation7], 1024
    $region65: #{generator_cgan_forward.1} parent=1 // pred_fallthru
      _
    // Predicated region
    $region66: #{generator_cgan_forward.1} parent=1 // pred_check
      _
    $region67: #{generator_cgan_forward.1} parent=1 // pred_check_branch
      %123 = sbr.rel (0) target = $region69
    $region68: #{generator_cgan_forward.1} parent=1 // pred_region
      %125 = dma.done [#allocation10], 16
    $region69: #{generator_cgan_forward.1} parent=1 // pred_fallthru
      _
    // Predicated region
    $region70: #{generator_cgan_forward.1} parent=1 // pred_check
      _
    $region71: #{generator_cgan_forward.1} parent=1 // pred_check_branch
      %127 = sbr.rel (0) target = $region73
    $region72: #{generator_cgan_forward.1} parent=1 // pred_region
      %129 = dma.done [#allocation10], 1024
    $region73: #{generator_cgan_forward.1} parent=1 // pred_fallthru
      _
    // Predicated region
    $region74: #{generator_cgan_forward.1} parent=1 // pred_check
      _
    $region75: #{generator_cgan_forward.1} parent=1 // pred_check_branch
      %131 = sbr.rel (0) target = $region77
    $region76: #{generator_cgan_forward.1} parent=1 // pred_region
      %133 = dma.done [#allocation13], 16
    $region77: #{generator_cgan_forward.1} parent=1 // pred_fallthru
      _
    %v134 = vlaneseq
    %v135 = vand.u32 %v134, 127
    %v136 = vadd.s32 %v135, 128
    %vm137 = vcmp.lt.s32.totalorder %v135, 192
    %vm138 = vcmp.lt.s32.totalorder %v136, 192
    %vm139 = vcmp.lt.s32.totalorder %v135, 0
    %v140 = vsub.s32 0, %v135
    %v141 = vsel %vm139, %v140, %v135
    %v142 = vshrl.u32 %v141, 6
    %v143 = vand.u32 %v141, 63
    %v144 = vsub.s32 0, %v143
    %v145 = vsel %vm139, %v144, %v143
    %vm146 = vcmp.lt.s32.totalorder %v136, 0
    %v147 = vsub.s32 0, %v136
    %v148 = vsel %vm146, %v147, %v136
    %v149 = vshrl.u32 %v148, 6
    %v150 = vand.u32 %v148, 63
    %v151 = vsub.s32 0, %v150
    %v152 = vsel %vm146, %v151, %v150
    %vm153 = vcmp.ne.s32.totalorder %v145, 0
    %vm154 = vcmp.ne.s32.totalorder %v152, 0
    %vm155 = vcmp.lt.s32.totalorder %v145, 0
    %vm156 = vcmp.lt.s32.totalorder %v152, 0
    %vm157 = vmand %vm155, %vm153
    %vm158 = vmand %vm156, %vm154
    %v159 = vadd.s32 %v145, 64
    %v160 = vadd.s32 %v152, 64
    %v161 = vsel %vm157, %v159, %v145
    %v162 = vsel %vm158, %v160, %v152
    %vm163 = vcmp.lt.s32.totalorder %v161, 32
    %vm164 = vcmp.lt.s32.totalorder %v162, 32
    %v165 = vld [vmem:[%s0] sm:$0xff]
    %v166 = vld [vmem:[%s0 + $0x8] sm:$0xff]
    %v167 = vld [vmem:[%s0 + $0x10] sm:$0xff]
    %v168 = vld [vmem:[%s0 + $0x18] sm:$0xff]
    %v169 = vld [vmem:[%s0 + $0x20] sm:$0xff]
    %v170 = vld [vmem:[%s0 + $0x28] sm:$0xff]
    %v171 = vld [vmem:[%s0 + $0x30] sm:$0xff]
    %v172 = vld [vmem:[%s0 + $0x38] sm:$0xff]
    %v173 = vld [vmem:[%s2] sm:$0xff]
    %v174 = vld [vmem:[%s4] sm:$0x3]
    %v176 = vperm.slane %v174, 0
    %v177 = vperm.slane %v174, 1
    %181 = vst [vmem:[#allocation1] ss:$2 sm:$0xff] %v173
    %v182 = vld.sshfl [vmem:[#allocation1] sm:$0xff pattern:$0x75316420]
    %v183 = vld.sshfl [vmem:[#allocation1 + $0x8] sm:$0xff pattern:$0x75316420]
    %vm184 = vcmask 31744
    %v186 = vsel %vm184, %v165, 0
    %v189 = vsel %vm184, %v166, 0
    %v192 = vsel %vm184, %v167, 0
    %v195 = vsel %vm184, %v168, 0
    %v198 = vsel %vm184, %v169, 0
    %v201 = vsel %vm184, %v170, 0
    %v204 = vsel %vm184, %v171, 0
    %v207 = vsel %vm184, %v172, 0
    %vm209 = vcmask 1043456
    %v210 = vsel %vm209, %v182, 0
    %v212 = vsel %vm209, %v183, 0
    %214 = vmatpush.msra.mxu0 0.0
    %215 = vmatpush.msra.mxu0 0.0
    %216 = vmatpush.msra.mxu0 0.0
    %217 = vmatpush.msra.mxu0 0.0
    %218 = vmatpush.msra.mxu0 0.0
    %219 = vmatpush.msra.mxu0 0.0
    %220 = vmatpush.msra.mxu0 0.0
    %221 = vmatpush.msra.mxu0 0.0
    %222 = vmatpush.msra.mxu0 0.0
    %223 = vmatpush.msra.mxu0 0.0
    %224 = vmatpush.msra.mxu0 0.0
    %225 = vmatpush.msra.mxu0 0.0
    %226 = vmatpush.msra.mxu0 0.0
    %227 = vmatpush.msra.mxu0 0.0
    %228 = vmatpush.msra.mxu0 0.0
    %229 = vmatpush.msra.mxu0 %v210
    %230 = vmatmul.f32.gmra.mxu0 %v186
    %v231 = vpop.f32.mrf.mxu0
    %v232 = vadd.f32 %v176, %v231
    %233 = vmatmul.f32.gmra.mxu0 %v189
    %v234 = vpop.f32.mrf.mxu0
    %v235 = vadd.f32 %v176, %v234
    %236 = vmatmul.f32.gmra.mxu0 %v192
    %v237 = vpop.f32.mrf.mxu0
    %v238 = vadd.f32 %v176, %v237
    %239 = vmatmul.f32.gmra.mxu0 %v195
    %v240 = vpop.f32.mrf.mxu0
    %v241 = vadd.f32 %v176, %v240
    %242 = vmatmul.f32.gmra.mxu0 %v198
    %v243 = vpop.f32.mrf.mxu0
    %v244 = vadd.f32 %v176, %v243
    %245 = vmatmul.f32.gmra.mxu0 %v201
    %v246 = vpop.f32.mrf.mxu0
    %v247 = vadd.f32 %v176, %v246
    %248 = vmatmul.f32.gmra.mxu0 %v204
    %v249 = vpop.f32.mrf.mxu0
    %v250 = vadd.f32 %v176, %v249
    %251 = vmatmul.f32.gmra.mxu0 %v207
    %v252 = vpop.f32.mrf.mxu0
    %v253 = vadd.f32 %v176, %v252
    %254 = vdwg.mxu0
    %255 = vmatpush.msra.mxu0 0.0
    %256 = vmatpush.msra.mxu0 0.0
    %257 = vmatpush.msra.mxu0 0.0
    %258 = vmatpush.msra.mxu0 0.0
    %259 = vmatpush.msra.mxu0 0.0
    %260 = vmatpush.msra.mxu0 0.0
    %261 = vmatpush.msra.mxu0 0.0
    %262 = vmatpush.msra.mxu0 0.0
    %263 = vmatpush.msra.mxu0 0.0
    %264 = vmatpush.msra.mxu0 0.0
    %265 = vmatpush.msra.mxu0 0.0
    %266 = vmatpush.msra.mxu0 0.0
    %267 = vmatpush.msra.mxu0 0.0
    %268 = vmatpush.msra.mxu0 0.0
    %269 = vmatpush.msra.mxu0 0.0
    %270 = vmatpush.msra.mxu0 %v212
    %271 = vmatmul.f32.gmra.mxu0 %v186
    %v272 = vpop.f32.mrf.mxu0
    %v273 = vadd.f32 %v177, %v272
    %274 = vmatmul.f32.gmra.mxu0 %v189
    %v275 = vpop.f32.mrf.mxu0
    %v276 = vadd.f32 %v177, %v275
    %277 = vmatmul.f32.gmra.mxu0 %v192
    %v278 = vpop.f32.mrf.mxu0
    %v279 = vadd.f32 %v177, %v278
    %280 = vmatmul.f32.gmra.mxu0 %v195
    %v281 = vpop.f32.mrf.mxu0
    %v282 = vadd.f32 %v177, %v281
    %283 = vmatmul.f32.gmra.mxu0 %v198
    %v284 = vpop.f32.mrf.mxu0
    %v285 = vadd.f32 %v177, %v284
    %286 = vmatmul.f32.gmra.mxu0 %v201
    %v287 = vpop.f32.mrf.mxu0
    %v288 = vadd.f32 %v177, %v287
    %289 = vmatmul.f32.gmra.mxu0 %v204
    %v290 = vpop.f32.mrf.mxu0
    %v291 = vadd.f32 %v177, %v290
    %292 = vmatmul.f32.gmra.mxu0 %v207
    %v293 = vpop.f32.mrf.mxu0
    %v294 = vadd.f32 %v177, %v293
    %295 = vdwg.mxu0
    %296 = vst [vmem:[#allocation3] sm:$0xff] %v232
    %297 = vst [vmem:[#allocation3 + $0x8] sm:$0xff] %v273
    %298 = vst [vmem:[#allocation3 + $0x10] sm:$0xff] %v235
    %299 = vst [vmem:[#allocation3 + $0x18] sm:$0xff] %v276
    %300 = vst [vmem:[#allocation3 + $0x20] sm:$0xff] %v238
    %301 = vst [vmem:[#allocation3 + $0x28] sm:$0xff] %v279
    %302 = vst [vmem:[#allocation3 + $0x30] sm:$0xff] %v241
    %303 = vst [vmem:[#allocation3 + $0x38] sm:$0xff] %v282
    %304 = vst [vmem:[#allocation3 + $0x40] sm:$0xff] %v244
    %305 = vst [vmem:[#allocation3 + $0x48] sm:$0xff] %v285
    %306 = vst [vmem:[#allocation3 + $0x50] sm:$0xff] %v247
    %307 = vst [vmem:[#allocation3 + $0x58] sm:$0xff] %v288
    %308 = vst [vmem:[#allocation3 + $0x60] sm:$0xff] %v250
    %309 = vst [vmem:[#allocation3 + $0x68] sm:$0xff] %v291
    %310 = vst [vmem:[#allocation3 + $0x70] sm:$0xff] %v253
    %311 = vst [vmem:[#allocation3 + $0x78] sm:$0xff] %v294
    %v312 = vld [vmem:[%s3] sm:$0xff]
    %v313 = vld [vmem:[%s3 + $0x8] sm:$0xff]
    %v314 = vld [vmem:[%s3 + $0x10] sm:$0xff]
    %v315 = vld [vmem:[%s3 + $0x18] sm:$0xff]
    %v316 = vld [vmem:[%s3 + $0x20] sm:$0xff]
    %v317 = vld [vmem:[%s3 + $0x28] sm:$0xff]
    %v318 = vld [vmem:[%s3 + $0x30] sm:$0xff]
    %v319 = vld [vmem:[%s3 + $0x38] sm:$0xff]
    %v320 = vld [vmem:[%s3 + $0x40] sm:$0xff]
    %v321 = vld [vmem:[%s3 + $0x48] sm:$0xff]
    %v322 = vld [vmem:[%s3 + $0x50] sm:$0xff]
    %v323 = vld [vmem:[%s3 + $0x58] sm:$0xff]
    %v324 = vld [vmem:[%s3 + $0x60] sm:$0xff]
    %v325 = vld [vmem:[%s3 + $0x68] sm:$0xff]
    %v326 = vld [vmem:[%s3 + $0x70] sm:$0xff]
    %v327 = vld [vmem:[%s3 + $0x78] sm:$0xff]
    %v328 = vld [vmem:[#allocation3] sm:$0xff]
    %v329 = vld [vmem:[#allocation3 + $0x8] sm:$0xff]
    %v330 = vld [vmem:[#allocation3 + $0x70] sm:$0xff]
    %v331 = vld [vmem:[#allocation3 + $0x78] sm:$0xff]
    %v332 = vsel %vm163, %v328, %v330
    %v333 = vsel %vm164, %v329, %v331
    %vm334 = vcmask 523264
    %v336 = vsel %vm334, 0.0, 0
    %338 = vmatpush.msra.mxu0 0.0
    %339 = vmatpush.msra.mxu0 0.0
    %340 = vmatpush.msra.mxu0 0.0
    %341 = vmatpush.msra.mxu0 0.0
    %342 = vmatpush.msra.mxu0 0.0
    %343 = vmatpush.msra.mxu0 0.0
    %344 = vmatpush.msra.mxu0 0.0
    %345 = vmatpush.msra.mxu0 0.0
    %346 = vmatpush.msra.mxu0 %v326
    %347 = vmatpush.msra.mxu0 %v324
    %348 = vmatpush.msra.mxu0 %v322
    %349 = vmatpush.msra.mxu0 %v320
    %350 = vmatpush.msra.mxu0 %v318
    %351 = vmatpush.msra.mxu0 %v316
    %352 = vmatpush.msra.mxu0 %v314
    %353 = vmatpush.msra.mxu0 %v312
    %354 = vmatmul.f32.gmra.mxu0 %v336
    %v355 = vpop.f32.mrf.mxu0
    %v356 = vadd.f32 0.0, %v355
    %357 = vdwg.mxu0
    %358 = vmatpush.msra.mxu0 0.0
    %359 = vmatpush.msra.mxu0 0.0
    %360 = vmatpush.msra.mxu0 0.0
    %361 = vmatpush.msra.mxu0 0.0
    %362 = vmatpush.msra.mxu0 0.0
    %363 = vmatpush.msra.mxu0 0.0
    %364 = vmatpush.msra.mxu0 0.0
    %365 = vmatpush.msra.mxu0 0.0
    %366 = vmatpush.msra.mxu0 %v327
    %367 = vmatpush.msra.mxu0 %v325
    %368 = vmatpush.msra.mxu0 %v323
    %369 = vmatpush.msra.mxu0 %v321
    %370 = vmatpush.msra.mxu0 %v319
    %371 = vmatpush.msra.mxu0 %v317
    %372 = vmatpush.msra.mxu0 %v315
    %373 = vmatpush.msra.mxu0 %v313
    %374 = vmatmul.f32.gmra.mxu0 %v336
    %v375 = vpop.f32.mrf.mxu0
    %v376 = vadd.f32 0.0, %v375
    %377 = vdwg.mxu0
    %v378 = vadd.f32 %v332, %v356
    %v379 = vadd.f32 %v333, %v376
    %v380 = vtanh.pop %v378
    %v381 = vtanh.pop %v379
    %v382 = vmul.f32 %v380, 0.5
    %v383 = vmul.f32 %v381, 0.5
    %v384 = vadd.f32 %v382, 0.5
    %v385 = vadd.f32 %v383, 0.5
    %v386 = vsel %vm137, %v384, %v380
    %v387 = vsel %vm138, %v385, %v381
    %v388 = vmul.f32 %v386, 0.0
    %390 = vrot.lane.b32.xlu0 %v387, 64
    %v391 = vpop.permute.xlu0 %390
    %v393 = vmul.f32 %v386, %v391
    %395 = vrot.lane.b32.xlu0 %v393, 64
    %v396 = vpop.permute.xlu0 %395
    %v398 = vadd.f32 %v388, %v396
    %v399 = vtanh.pop %v398
    %401 = vrot.lane.b32.xlu0 %v399, 64
    %v402 = vpop.permute.xlu0 %401
    %v404 = vmul.f32 %v387, %v402
    %vm405 = vcmask 261120
    %406 = vst.msk [vmem:[#allocation2] sm:$0xff] %vm405, %v404
    %vm407 = vcmask 523520
    %408 = vst.msk [vmem:[#allocation2 + $0x38] sm:$0xff] %vm407, %v404
    %v409 = vld [vmem:[#allocation3 + $0x10] sm:$0xff]
    %v410 = vld [vmem:[#allocation3 + $0x18] sm:$0xff]
    %v411 = vld [vmem:[#allocation3 + $0x60] sm:$0xff]
    %v412 = vld [vmem:[#allocation3 + $0x68] sm:$0xff]
    %v413 = vsel %vm163, %v409, %v411
    %v414 = vsel %vm164, %v410, %v412
    %v416 = vsel %vm334, %v404, 0
    %418 = vmatpush.msra.mxu0 0.0
    %419 = vmatpush.msra.mxu0 0.0
    %420 = vmatpush.msra.mxu0 0.0
    %421 = vmatpush.msra.mxu0 0.0
    %422 = vmatpush.msra.mxu0 0.0
    %423 = vmatpush.msra.mxu0 0.0
    %424 = vmatpush.msra.mxu0 0.0
    %425 = vmatpush.msra.mxu0 0.0
    %426 = vmatpush.msra.mxu0 %v326
    %427 = vmatpush.msra.mxu0 %v324
    %428 = vmatpush.msra.mxu0 %v322
    %429 = vmatpush.msra.mxu0 %v320
    %430 = vmatpush.msra.mxu0 %v318
    %431 = vmatpush.msra.mxu0 %v316
    %432 = vmatpush.msra.mxu0 %v314
    %433 = vmatpush.msra.mxu0 %v312
    %434 = vmatmul.f32.gmra.mxu0 %v416
    %v435 = vpop.f32.mrf.mxu0
    %v436 = vadd.f32 0.0, %v435
    %437 = vdwg.mxu0
    %438 = vmatpush.msra.mxu0 0.0
    %439 = vmatpush.msra.mxu0 0.0
    %440 = vmatpush.msra.mxu0 0.0
    %441 = vmatpush.msra.mxu0 0.0
    %442 = vmatpush.msra.mxu0 0.0
    %443 = vmatpush.msra.mxu0 0.0
    %444 = vmatpush.msra.mxu0 0.0
    %445 = vmatpush.msra.mxu0 0.0
    %446 = vmatpush.msra.mxu0 %v327
    %447 = vmatpush.msra.mxu0 %v325
    %448 = vmatpush.msra.mxu0 %v323
    %449 = vmatpush.msra.mxu0 %v321
    %450 = vmatpush.msra.mxu0 %v319
    %451 = vmatpush.msra.mxu0 %v317
    %452 = vmatpush.msra.mxu0 %v315
    %453 = vmatpush.msra.mxu0 %v313
    %454 = vmatmul.f32.gmra.mxu0 %v416
    %v455 = vpop.f32.mrf.mxu0
    %v456 = vadd.f32 0.0, %v455
    %457 = vdwg.mxu0
    %v458 = vadd.f32 %v413, %v436
    %v459 = vadd.f32 %v414, %v456
    %v460 = vtanh.pop %v458
    %v461 = vtanh.pop %v459
    %v462 = vmul.f32 %v460, 0.5
    %v463 = vmul.f32 %v461, 0.5
    %v464 = vadd.f32 %v462, 0.5
    %v465 = vadd.f32 %v463, 0.5
    %v466 = vsel %vm137, %v464, %v460
    %v467 = vsel %vm138, %v465, %v461
    %v468 = vmul.f32 %v466, %v398
    %470 = vrot.lane.b32.xlu0 %v467, 64
    %v471 = vpop.permute.xlu0 %470
    %v473 = vmul.f32 %v466, %v471
    %475 = vrot.lane.b32.xlu0 %v473, 64
    %v476 = vpop.permute.xlu0 %475
    %v478 = vadd.f32 %v468, %v476
    %v479 = vtanh.pop %v478
    %481 = vrot.lane.b32.xlu0 %v479, 64
    %v482 = vpop.permute.xlu0 %481
    %v484 = vmul.f32 %v467, %v482
    %485 = vst.msk [vmem:[#allocation2 + $0x8] sm:$0xff] %vm405, %v484
    %486 = vst.msk [vmem:[#allocation2 + $0x30] sm:$0xff] %vm407, %v484
    %v487 = vld [vmem:[#allocation3 + $0x20] sm:$0xff]
    %v488 = vld [vmem:[#allocation3 + $0x28] sm:$0xff]
    %v489 = vld [vmem:[#allocation3 + $0x50] sm:$0xff]
    %v490 = vld [vmem:[#allocation3 + $0x58] sm:$0xff]
    %v491 = vsel %vm163, %v487, %v489
    %v492 = vsel %vm164, %v488, %v490
    %v494 = vsel %vm334, %v484, 0
    %496 = vmatpush.msra.mxu0 0.0
    %497 = vmatpush.msra.mxu0 0.0
    %498 = vmatpush.msra.mxu0 0.0
    %499 = vmatpush.msra.mxu0 0.0
    %500 = vmatpush.msra.mxu0 0.0
    %501 = vmatpush.msra.mxu0 0.0
    %502 = vmatpush.msra.mxu0 0.0
    %503 = vmatpush.msra.mxu0 0.0
    %504 = vmatpush.msra.mxu0 %v326
    %505 = vmatpush.msra.mxu0 %v324
    %506 = vmatpush.msra.mxu0 %v322
    %507 = vmatpush.msra.mxu0 %v320
    %508 = vmatpush.msra.mxu0 %v318
    %509 = vmatpush.msra.mxu0 %v316
    %510 = vmatpush.msra.mxu0 %v314
    %511 = vmatpush.msra.mxu0 %v312
    %512 = vmatmul.f32.gmra.mxu0 %v494
    %v513 = vpop.f32.mrf.mxu0
    %v514 = vadd.f32 0.0, %v513
    %515 = vdwg.mxu0
    %516 = vmatpush.msra.mxu0 0.0
    %517 = vmatpush.msra.mxu0 0.0
    %518 = vmatpush.msra.mxu0 0.0
    %519 = vmatpush.msra.mxu0 0.0
    %520 = vmatpush.msra.mxu0 0.0
    %521 = vmatpush.msra.mxu0 0.0
    %522 = vmatpush.msra.mxu0 0.0
    %523 = vmatpush.msra.mxu0 0.0
    %524 = vmatpush.msra.mxu0 %v327
    %525 = vmatpush.msra.mxu0 %v325
    %526 = vmatpush.msra.mxu0 %v323
    %527 = vmatpush.msra.mxu0 %v321
    %528 = vmatpush.msra.mxu0 %v319
    %529 = vmatpush.msra.mxu0 %v317
    %530 = vmatpush.msra.mxu0 %v315
    %531 = vmatpush.msra.mxu0 %v313
    %532 = vmatmul.f32.gmra.mxu0 %v494
    %v533 = vpop.f32.mrf.mxu0
    %v534 = vadd.f32 0.0, %v533
    %535 = vdwg.mxu0
    %v536 = vadd.f32 %v491, %v514
    %v537 = vadd.f32 %v492, %v534
    %v538 = vtanh.pop %v536
    %v539 = vtanh.pop %v537
    %v540 = vmul.f32 %v538, 0.5
    %v541 = vmul.f32 %v539, 0.5
    %v542 = vadd.f32 %v540, 0.5
    %v543 = vadd.f32 %v541, 0.5
    %v544 = vsel %vm137, %v542, %v538
    %v545 = vsel %vm138, %v543, %v539
    %v546 = vmul.f32 %v544, %v478
    %548 = vrot.lane.b32.xlu0 %v545, 64
    %v549 = vpop.permute.xlu0 %548
    %v551 = vmul.f32 %v544, %v549
    %553 = vrot.lane.b32.xlu0 %v551, 64
    %v554 = vpop.permute.xlu0 %553
    %v556 = vadd.f32 %v546, %v554
    %v557 = vtanh.pop %v556
    %559 = vrot.lane.b32.xlu0 %v557, 64
    %v560 = vpop.permute.xlu0 %559
    %v562 = vmul.f32 %v545, %v560
    %563 = vst.msk [vmem:[#allocation2 + $0x10] sm:$0xff] %vm405, %v562
    %564 = vst.msk [vmem:[#allocation2 + $0x28] sm:$0xff] %vm407, %v562
    %v565 = vld [vmem:[#allocation3 + $0x30] sm:$0xff]
    %v566 = vld [vmem:[#allocation3 + $0x38] sm:$0xff]
    %v567 = vld [vmem:[#allocation3 + $0x40] sm:$0xff]
    %v568 = vld [vmem:[#allocation3 + $0x48] sm:$0xff]
    %v569 = vsel %vm163, %v565, %v567
    %v570 = vsel %vm164, %v566, %v568
    %v572 = vsel %vm334, %v562, 0
    %574 = vmatpush.msra.mxu0 0.0
    %575 = vmatpush.msra.mxu0 0.0
    %576 = vmatpush.msra.mxu0 0.0
    %577 = vmatpush.msra.mxu0 0.0
    %578 = vmatpush.msra.mxu0 0.0
    %579 = vmatpush.msra.mxu0 0.0
    %580 = vmatpush.msra.mxu0 0.0
    %581 = vmatpush.msra.mxu0 0.0
    %582 = vmatpush.msra.mxu0 %v326
    %583 = vmatpush.msra.mxu0 %v324
    %584 = vmatpush.msra.mxu0 %v322
    %585 = vmatpush.msra.mxu0 %v320
    %586 = vmatpush.msra.mxu0 %v318
    %587 = vmatpush.msra.mxu0 %v316
    %588 = vmatpush.msra.mxu0 %v314
    %589 = vmatpush.msra.mxu0 %v312
    %590 = vmatmul.f32.gmra.mxu0 %v572
    %v591 = vpop.f32.mrf.mxu0
    %v592 = vadd.f32 0.0, %v591
    %593 = vdwg.mxu0
    %594 = vmatpush.msra.mxu0 0.0
    %595 = vmatpush.msra.mxu0 0.0
    %596 = vmatpush.msra.mxu0 0.0
    %597 = vmatpush.msra.mxu0 0.0
    %598 = vmatpush.msra.mxu0 0.0
    %599 = vmatpush.msra.mxu0 0.0
    %600 = vmatpush.msra.mxu0 0.0
    %601 = vmatpush.msra.mxu0 0.0
    %602 = vmatpush.msra.mxu0 %v327
    %603 = vmatpush.msra.mxu0 %v325
    %604 = vmatpush.msra.mxu0 %v323
    %605 = vmatpush.msra.mxu0 %v321
    %606 = vmatpush.msra.mxu0 %v319
    %607 = vmatpush.msra.mxu0 %v317
    %608 = vmatpush.msra.mxu0 %v315
    %609 = vmatpush.msra.mxu0 %v313
    %610 = vmatmul.f32.gmra.mxu0 %v572
    %v611 = vpop.f32.mrf.mxu0
    %v612 = vadd.f32 0.0, %v611
    %613 = vdwg.mxu0
    %v614 = vadd.f32 %v569, %v592
    %v615 = vadd.f32 %v570, %v612
    %v616 = vtanh.pop %v614
    %v617 = vtanh.pop %v615
    %v618 = vmul.f32 %v616, 0.5
    %v619 = vmul.f32 %v617, 0.5
    %v620 = vadd.f32 %v618, 0.5
    %v621 = vadd.f32 %v619, 0.5
    %v622 = vsel %vm137, %v620, %v616
    %v623 = vsel %vm138, %v621, %v617
    %v624 = vmul.f32 %v622, %v556
    %626 = vrot.lane.b32.xlu0 %v623, 64
    %v627 = vpop.permute.xlu0 %626
    %v629 = vmul.f32 %v622, %v627
    %631 = vrot.lane.b32.xlu0 %v629, 64
    %v632 = vpop.permute.xlu0 %631
    %v634 = vadd.f32 %v624, %v632
    %v635 = vtanh.pop %v634
    %637 = vrot.lane.b32.xlu0 %v635, 64
    %v638 = vpop.permute.xlu0 %637
    %v640 = vmul.f32 %v623, %v638
    %641 = vst.msk [vmem:[#allocation2 + $0x18] sm:$0xff] %vm405, %v640
    %642 = vst.msk [vmem:[#allocation2 + $0x20] sm:$0xff] %vm407, %v640
    %v643 = vld [vmem:[#allocation3 + $0x40] sm:$0xff]
    %v644 = vld [vmem:[#allocation3 + $0x48] sm:$0xff]
    %v645 = vld [vmem:[#allocation3 + $0x30] sm:$0xff]
    %v646 = vld [vmem:[#allocation3 + $0x38] sm:$0xff]
    %v647 = vsel %vm163, %v643, %v645
    %v648 = vsel %vm164, %v644, %v646
    %v650 = vsel %vm334, %v640, 0
    %652 = vmatpush.msra.mxu0 0.0
    %653 = vmatpush.msra.mxu0 0.0
    %654 = vmatpush.msra.mxu0 0.0
    %655 = vmatpush.msra.mxu0 0.0
    %656 = vmatpush.msra.mxu0 0.0
    %657 = vmatpush.msra.mxu0 0.0
    %658 = vmatpush.msra.mxu0 0.0
    %659 = vmatpush.msra.mxu0 0.0
    %660 = vmatpush.msra.mxu0 %v326
    %661 = vmatpush.msra.mxu0 %v324
    %662 = vmatpush.msra.mxu0 %v322
    %663 = vmatpush.msra.mxu0 %v320
    %664 = vmatpush.msra.mxu0 %v318
    %665 = vmatpush.msra.mxu0 %v316
    %666 = vmatpush.msra.mxu0 %v314
    %667 = vmatpush.msra.mxu0 %v312
    %668 = vmatmul.f32.gmra.mxu0 %v650
    %v669 = vpop.f32.mrf.mxu0
    %v670 = vadd.f32 0.0, %v669
    %671 = vdwg.mxu0
    %672 = vmatpush.msra.mxu0 0.0
    %673 = vmatpush.msra.mxu0 0.0
    %674 = vmatpush.msra.mxu0 0.0
    %675 = vmatpush.msra.mxu0 0.0
    %676 = vmatpush.msra.mxu0 0.0
    %677 = vmatpush.msra.mxu0 0.0
    %678 = vmatpush.msra.mxu0 0.0
    %679 = vmatpush.msra.mxu0 0.0
    %680 = vmatpush.msra.mxu0 %v327
    %681 = vmatpush.msra.mxu0 %v325
    %682 = vmatpush.msra.mxu0 %v323
    %683 = vmatpush.msra.mxu0 %v321
    %684 = vmatpush.msra.mxu0 %v319
    %685 = vmatpush.msra.mxu0 %v317
    %686 = vmatpush.msra.mxu0 %v315
    %687 = vmatpush.msra.mxu0 %v313
    %688 = vmatmul.f32.gmra.mxu0 %v650
    %v689 = vpop.f32.mrf.mxu0
    %v690 = vadd.f32 0.0, %v689
    %691 = vdwg.mxu0
    %v692 = vadd.f32 %v647, %v670
    %v693 = vadd.f32 %v648, %v690
    %v694 = vtanh.pop %v692
    %v695 = vtanh.pop %v693
    %v696 = vmul.f32 %v694, 0.5
    %v697 = vmul.f32 %v695, 0.5
    %v698 = vadd.f32 %v696, 0.5
    %v699 = vadd.f32 %v697, 0.5
    %v700 = vsel %vm137, %v698, %v694
    %v701 = vsel %vm138, %v699, %v695
    %v702 = vmul.f32 %v700, %v634
    %704 = vrot.lane.b32.xlu0 %v701, 64
    %v705 = vpop.permute.xlu0 %704
    %v707 = vmul.f32 %v700, %v705
    %709 = vrot.lane.b32.xlu0 %v707, 64
    %v710 = vpop.permute.xlu0 %709
    %v712 = vadd.f32 %v702, %v710
    %v713 = vtanh.pop %v712
    %715 = vrot.lane.b32.xlu0 %v713, 64
    %v716 = vpop.permute.xlu0 %715
    %v718 = vmul.f32 %v701, %v716
    %719 = vst.msk [vmem:[#allocation2 + $0x20] sm:$0xff] %vm405, %v718
    %720 = vst.msk [vmem:[#allocation2 + $0x18] sm:$0xff] %vm407, %v718
    %v721 = vld [vmem:[#allocation3 + $0x50] sm:$0xff]
    %v722 = vld [vmem:[#allocation3 + $0x58] sm:$0xff]
    %v723 = vld [vmem:[#allocation3 + $0x20] sm:$0xff]
    %v724 = vld [vmem:[#allocation3 + $0x28] sm:$0xff]
    %v725 = vsel %vm163, %v721, %v723
    %v726 = vsel %vm164, %v722, %v724
    %v728 = vsel %vm334, %v718, 0
    %730 = vmatpush.msra.mxu0 0.0
    %731 = vmatpush.msra.mxu0 0.0
    %732 = vmatpush.msra.mxu0 0.0
    %733 = vmatpush.msra.mxu0 0.0
    %734 = vmatpush.msra.mxu0 0.0
    %735 = vmatpush.msra.mxu0 0.0
    %736 = vmatpush.msra.mxu0 0.0
    %737 = vmatpush.msra.mxu0 0.0
    %738 = vmatpush.msra.mxu0 %v326
    %739 = vmatpush.msra.mxu0 %v324
    %740 = vmatpush.msra.mxu0 %v322
    %741 = vmatpush.msra.mxu0 %v320
    %742 = vmatpush.msra.mxu0 %v318
    %743 = vmatpush.msra.mxu0 %v316
    %744 = vmatpush.msra.mxu0 %v314
    %745 = vmatpush.msra.mxu0 %v312
    %746 = vmatmul.f32.gmra.mxu0 %v728
    %v747 = vpop.f32.mrf.mxu0
    %v748 = vadd.f32 0.0, %v747
    %749 = vdwg.mxu0
    %750 = vmatpush.msra.mxu0 0.0
    %751 = vmatpush.msra.mxu0 0.0
    %752 = vmatpush.msra.mxu0 0.0
    %753 = vmatpush.msra.mxu0 0.0
    %754 = vmatpush.msra.mxu0 0.0
    %755 = vmatpush.msra.mxu0 0.0
    %756 = vmatpush.msra.mxu0 0.0
    %757 = vmatpush.msra.mxu0 0.0
    %758 = vmatpush.msra.mxu0 %v327
    %759 = vmatpush.msra.mxu0 %v325
    %760 = vmatpush.msra.mxu0 %v323
    %761 = vmatpush.msra.mxu0 %v321
    %762 = vmatpush.msra.mxu0 %v319
    %763 = vmatpush.msra.mxu0 %v317
    %764 = vmatpush.msra.mxu0 %v315
    %765 = vmatpush.msra.mxu0 %v313
    %766 = vmatmul.f32.gmra.mxu0 %v728
    %v767 = vpop.f32.mrf.mxu0
    %v768 = vadd.f32 0.0, %v767
    %769 = vdwg.mxu0
    %v770 = vadd.f32 %v725, %v748
    %v771 = vadd.f32 %v726, %v768
    %v772 = vtanh.pop %v770
    %v773 = vtanh.pop %v771
    %v774 = vmul.f32 %v772, 0.5
    %v775 = vmul.f32 %v773, 0.5
    %v776 = vadd.f32 %v774, 0.5
    %v777 = vadd.f32 %v775, 0.5
    %v778 = vsel %vm137, %v776, %v772
    %v779 = vsel %vm138, %v777, %v773
    %v780 = vmul.f32 %v778, %v712
    %782 = vrot.lane.b32.xlu0 %v779, 64
    %v783 = vpop.permute.xlu0 %782
    %v785 = vmul.f32 %v778, %v783
    %787 = vrot.lane.b32.xlu0 %v785, 64
    %v788 = vpop.permute.xlu0 %787
    %v790 = vadd.f32 %v780, %v788
    %v791 = vtanh.pop %v790
    %793 = vrot.lane.b32.xlu0 %v791, 64
    %v794 = vpop.permute.xlu0 %793
    %v796 = vmul.f32 %v779, %v794
    %797 = vst.msk [vmem:[#allocation2 + $0x28] sm:$0xff] %vm405, %v796
    %798 = vst.msk [vmem:[#allocation2 + $0x10] sm:$0xff] %vm407, %v796
    %v799 = vld [vmem:[#allocation3 + $0x60] sm:$0xff]
    %v800 = vld [vmem:[#allocation3 + $0x68] sm:$0xff]
    %v801 = vld [vmem:[#allocation3 + $0x10] sm:$0xff]
    %v802 = vld [vmem:[#allocation3 + $0x18] sm:$0xff]
    %v803 = vsel %vm163, %v799, %v801
    %v804 = vsel %vm164, %v800, %v802
    %v806 = vsel %vm334, %v796, 0
    %808 = vmatpush.msra.mxu0 0.0
    %809 = vmatpush.msra.mxu0 0.0
    %810 = vmatpush.msra.mxu0 0.0
    %811 = vmatpush.msra.mxu0 0.0
    %812 = vmatpush.msra.mxu0 0.0
    %813 = vmatpush.msra.mxu0 0.0
    %814 = vmatpush.msra.mxu0 0.0
    %815 = vmatpush.msra.mxu0 0.0
    %816 = vmatpush.msra.mxu0 %v326
    %817 = vmatpush.msra.mxu0 %v324
    %818 = vmatpush.msra.mxu0 %v322
    %819 = vmatpush.msra.mxu0 %v320
    %820 = vmatpush.msra.mxu0 %v318
    %821 = vmatpush.msra.mxu0 %v316
    %822 = vmatpush.msra.mxu0 %v314
    %823 = vmatpush.msra.mxu0 %v312
    %824 = vmatmul.f32.gmra.mxu0 %v806
    %v825 = vpop.f32.mrf.mxu0
    %v826 = vadd.f32 0.0, %v825
    %827 = vdwg.mxu0
    %828 = vmatpush.msra.mxu0 0.0
    %829 = vmatpush.msra.mxu0 0.0
    %830 = vmatpush.msra.mxu0 0.0
    %831 = vmatpush.msra.mxu0 0.0
    %832 = vmatpush.msra.mxu0 0.0
    %833 = vmatpush.msra.mxu0 0.0
    %834 = vmatpush.msra.mxu0 0.0
    %835 = vmatpush.msra.mxu0 0.0
    %836 = vmatpush.msra.mxu0 %v327
    %837 = vmatpush.msra.mxu0 %v325
    %838 = vmatpush.msra.mxu0 %v323
    %839 = vmatpush.msra.mxu0 %v321
    %840 = vmatpush.msra.mxu0 %v319
    %841 = vmatpush.msra.mxu0 %v317
    %842 = vmatpush.msra.mxu0 %v315
    %843 = vmatpush.msra.mxu0 %v313
    %844 = vmatmul.f32.gmra.mxu0 %v806
    %v845 = vpop.f32.mrf.mxu0
    %v846 = vadd.f32 0.0, %v845
    %847 = vdwg.mxu0
    %v848 = vadd.f32 %v803, %v826
    %v849 = vadd.f32 %v804, %v846
    %v850 = vtanh.pop %v848
    %v851 = vtanh.pop %v849
    %v852 = vmul.f32 %v850, 0.5
    %v853 = vmul.f32 %v851, 0.5
    %v854 = vadd.f32 %v852, 0.5
    %v855 = vadd.f32 %v853, 0.5
    %v856 = vsel %vm137, %v854, %v850
    %v857 = vsel %vm138, %v855, %v851
    %v858 = vmul.f32 %v856, %v790
    %860 = vrot.lane.b32.xlu0 %v857, 64
    %v861 = vpop.permute.xlu0 %860
    %v863 = vmul.f32 %v856, %v861
    %865 = vrot.lane.b32.xlu0 %v863, 64
    %v866 = vpop.permute.xlu0 %865
    %v868 = vadd.f32 %v858, %v866
    %v869 = vtanh.pop %v868
    %871 = vrot.lane.b32.xlu0 %v869, 64
    %v872 = vpop.permute.xlu0 %871
    %v874 = vmul.f32 %v857, %v872
    %875 = vst.msk [vmem:[#allocation2 + $0x30] sm:$0xff] %vm405, %v874
    %876 = vst.msk [vmem:[#allocation2 + $0x8] sm:$0xff] %vm407, %v874
    %v877 = vld [vmem:[#allocation3 + $0x70] sm:$0xff]
    %v878 = vld [vmem:[#allocation3 + $0x78] sm:$0xff]
    %v879 = vld [vmem:[#allocation3] sm:$0xff]
    %v880 = vld [vmem:[#allocation3 + $0x8] sm:$0xff]
    %v881 = vsel %vm163, %v877, %v879
    %v882 = vsel %vm164, %v878, %v880
    %v884 = vsel %vm334, %v874, 0
    %886 = vmatpush.msra.mxu0 0.0
    %887 = vmatpush.msra.mxu0 0.0
    %888 = vmatpush.msra.mxu0 0.0
    %889 = vmatpush.msra.mxu0 0.0
    %890 = vmatpush.msra.mxu0 0.0
    %891 = vmatpush.msra.mxu0 0.0
    %892 = vmatpush.msra.mxu0 0.0
    %893 = vmatpush.msra.mxu0 0.0
    %894 = vmatpush.msra.mxu0 %v326
    %895 = vmatpush.msra.mxu0 %v324
    %896 = vmatpush.msra.mxu0 %v322
    %897 = vmatpush.msra.mxu0 %v320
    %898 = vmatpush.msra.mxu0 %v318
    %899 = vmatpush.msra.mxu0 %v316
    %900 = vmatpush.msra.mxu0 %v314
    %901 = vmatpush.msra.mxu0 %v312
    %902 = vmatmul.f32.gmra.mxu0 %v884
    %v903 = vpop.f32.mrf.mxu0
    %v904 = vadd.f32 0.0, %v903
    %905 = vdwg.mxu0
    %906 = vmatpush.msra.mxu0 0.0
    %907 = vmatpush.msra.mxu0 0.0
    %908 = vmatpush.msra.mxu0 0.0
    %909 = vmatpush.msra.mxu0 0.0
    %910 = vmatpush.msra.mxu0 0.0
    %911 = vmatpush.msra.mxu0 0.0
    %912 = vmatpush.msra.mxu0 0.0
    %913 = vmatpush.msra.mxu0 0.0
    %914 = vmatpush.msra.mxu0 %v327
    %915 = vmatpush.msra.mxu0 %v325
    %916 = vmatpush.msra.mxu0 %v323
    %917 = vmatpush.msra.mxu0 %v321
    %918 = vmatpush.msra.mxu0 %v319
    %919 = vmatpush.msra.mxu0 %v317
    %920 = vmatpush.msra.mxu0 %v315
    %921 = vmatpush.msra.mxu0 %v313
    %922 = vmatmul.f32.gmra.mxu0 %v884
    %v923 = vpop.f32.mrf.mxu0
    %v924 = vadd.f32 0.0, %v923
    %925 = vdwg.mxu0
    %v926 = vadd.f32 %v881, %v904
    %v927 = vadd.f32 %v882, %v924
    %v928 = vtanh.pop %v926
    %v929 = vtanh.pop %v927
    %v930 = vmul.f32 %v928, 0.5
    %v931 = vmul.f32 %v929, 0.5
    %v932 = vadd.f32 %v930, 0.5
    %v933 = vadd.f32 %v931, 0.5
    %v934 = vsel %vm137, %v932, %v928
    %v935 = vsel %vm138, %v933, %v929
    %v936 = vmul.f32 %v934, %v868
    %938 = vrot.lane.b32.xlu0 %v935, 64
    %v939 = vpop.permute.xlu0 %938
    %v941 = vmul.f32 %v934, %v939
    %943 = vrot.lane.b32.xlu0 %v941, 64
    %v944 = vpop.permute.xlu0 %943
    %v946 = vadd.f32 %v936, %v944
    %v947 = vtanh.pop %v946
    %949 = vrot.lane.b32.xlu0 %v947, 64
    %v950 = vpop.permute.xlu0 %949
    %v952 = vmul.f32 %v935, %v950
    %953 = vst.msk [vmem:[#allocation2 + $0x38] sm:$0xff] %vm405, %v952
    %954 = vst.msk [vmem:[#allocation2] sm:$0xff] %vm407, %v952
    %v955 = vld [vmem:[#allocation2] sm:$0xff]
    %v956 = vld [vmem:[#allocation2 + $0x8] sm:$0xff]
    %v957 = vld [vmem:[#allocation2 + $0x10] sm:$0xff]
    %v958 = vld [vmem:[#allocation2 + $0x18] sm:$0xff]
    %v959 = vld [vmem:[#allocation2 + $0x20] sm:$0xff]
    %v960 = vld [vmem:[#allocation2 + $0x28] sm:$0xff]
    %v961 = vld [vmem:[#allocation2 + $0x30] sm:$0xff]
    %v962 = vld [vmem:[#allocation2 + $0x38] sm:$0xff]
    %v963 = vld [vmem:[#allocation4] sm:$0xff]
    %v964 = vld [vmem:[#allocation4 + $0x8] sm:$0xff]
    %v965 = vld [vmem:[#allocation4 + $0x10] sm:$0xff]
    %v966 = vld [vmem:[#allocation4 + $0x18] sm:$0xff]
    %v967 = vld [vmem:[#allocation4 + $0x20] sm:$0xff]
    %v968 = vld [vmem:[#allocation4 + $0x28] sm:$0xff]
    %v969 = vld [vmem:[#allocation4 + $0x30] sm:$0xff]
    %v970 = vld [vmem:[#allocation4 + $0x38] sm:$0xff]
    %v971 = vld [vmem:[#allocation4 + $0x40] sm:$0xff]
    %v972 = vld [vmem:[#allocation4 + $0x48] sm:$0xff]
    %v973 = vld [vmem:[#allocation4 + $0x50] sm:$0xff]
    %v974 = vld [vmem:[#allocation4 + $0x58] sm:$0xff]
    %v975 = vld [vmem:[#allocation4 + $0x60] sm:$0xff]
    %v976 = vld [vmem:[#allocation4 + $0x68] sm:$0xff]
    %v977 = vld [vmem:[#allocation4 + $0x70] sm:$0xff]
    %v978 = vld [vmem:[#allocation4 + $0x78] sm:$0xff]
    %v979 = vld [vmem:[%s7] sm:$0x3]
    %v981 = vperm.slane %v979, 0
    %v982 = vperm.slane %v979, 1
    %v986 = vsel %vm334, %v955, 0
    %v989 = vsel %vm334, %v956, 0
    %v992 = vsel %vm334, %v957, 0
    %v995 = vsel %vm334, %v958, 0
    %v998 = vsel %vm334, %v959, 0
    %v1001 = vsel %vm334, %v960, 0
    %v1004 = vsel %vm334, %v961, 0
    %v1007 = vsel %vm334, %v962, 0
    %1009 = vmatpush.msra.mxu0 0.0
    %1010 = vmatpush.msra.mxu0 0.0
    %1011 = vmatpush.msra.mxu0 0.0
    %1012 = vmatpush.msra.mxu0 0.0
    %1013 = vmatpush.msra.mxu0 0.0
    %1014 = vmatpush.msra.mxu0 0.0
    %1015 = vmatpush.msra.mxu0 0.0
    %1016 = vmatpush.msra.mxu0 0.0
    %1017 = vmatpush.msra.mxu0 %v977
    %1018 = vmatpush.msra.mxu0 %v975
    %1019 = vmatpush.msra.mxu0 %v973
    %1020 = vmatpush.msra.mxu0 %v971
    %1021 = vmatpush.msra.mxu0 %v969
    %1022 = vmatpush.msra.mxu0 %v967
    %1023 = vmatpush.msra.mxu0 %v965
    %1024 = vmatpush.msra.mxu0 %v963
    %1025 = vmatmul.f32.gmra.mxu0 %v986
    %v1026 = vpop.f32.mrf.mxu0
    %v1027 = vadd.f32 %v981, %v1026
    %1028 = vmatmul.f32.gmra.mxu0 %v989
    %v1029 = vpop.f32.mrf.mxu0
    %v1030 = vadd.f32 %v981, %v1029
    %1031 = vmatmul.f32.gmra.mxu0 %v992
    %v1032 = vpop.f32.mrf.mxu0
    %v1033 = vadd.f32 %v981, %v1032
    %1034 = vmatmul.f32.gmra.mxu0 %v995
    %v1035 = vpop.f32.mrf.mxu0
    %v1036 = vadd.f32 %v981, %v1035
    %1037 = vmatmul.f32.gmra.mxu0 %v998
    %v1038 = vpop.f32.mrf.mxu0
    %v1039 = vadd.f32 %v981, %v1038
    %1040 = vmatmul.f32.gmra.mxu0 %v1001
    %v1041 = vpop.f32.mrf.mxu0
    %v1042 = vadd.f32 %v981, %v1041
    %1043 = vmatmul.f32.gmra.mxu0 %v1004
    %v1044 = vpop.f32.mrf.mxu0
    %v1045 = vadd.f32 %v981, %v1044
    %1046 = vmatmul.f32.gmra.mxu0 %v1007
    %v1047 = vpop.f32.mrf.mxu0
    %v1048 = vadd.f32 %v981, %v1047
    %1049 = vdwg.mxu0
    %1050 = vmatpush.msra.mxu0 0.0
    %1051 = vmatpush.msra.mxu0 0.0
    %1052 = vmatpush.msra.mxu0 0.0
    %1053 = vmatpush.msra.mxu0 0.0
    %1054 = vmatpush.msra.mxu0 0.0
    %1055 = vmatpush.msra.mxu0 0.0
    %1056 = vmatpush.msra.mxu0 0.0
    %1057 = vmatpush.msra.mxu0 0.0
    %1058 = vmatpush.msra.mxu0 %v978
    %1059 = vmatpush.msra.mxu0 %v976
    %1060 = vmatpush.msra.mxu0 %v974
    %1061 = vmatpush.msra.mxu0 %v972
    %1062 = vmatpush.msra.mxu0 %v970
    %1063 = vmatpush.msra.mxu0 %v968
    %1064 = vmatpush.msra.mxu0 %v966
    %1065 = vmatpush.msra.mxu0 %v964
    %1066 = vmatmul.f32.gmra.mxu0 %v986
    %v1067 = vpop.f32.mrf.mxu0
    %v1068 = vadd.f32 %v982, %v1067
    %1069 = vmatmul.f32.gmra.mxu0 %v989
    %v1070 = vpop.f32.mrf.mxu0
    %v1071 = vadd.f32 %v982, %v1070
    %1072 = vmatmul.f32.gmra.mxu0 %v992
    %v1073 = vpop.f32.mrf.mxu0
    %v1074 = vadd.f32 %v982, %v1073
    %1075 = vmatmul.f32.gmra.mxu0 %v995
    %v1076 = vpop.f32.mrf.mxu0
    %v1077 = vadd.f32 %v982, %v1076
    %1078 = vmatmul.f32.gmra.mxu0 %v998
    %v1079 = vpop.f32.mrf.mxu0
    %v1080 = vadd.f32 %v982, %v1079
    %1081 = vmatmul.f32.gmra.mxu0 %v1001
    %v1082 = vpop.f32.mrf.mxu0
    %v1083 = vadd.f32 %v982, %v1082
    %1084 = vmatmul.f32.gmra.mxu0 %v1004
    %v1085 = vpop.f32.mrf.mxu0
    %v1086 = vadd.f32 %v982, %v1085
    %1087 = vmatmul.f32.gmra.mxu0 %v1007
    %v1088 = vpop.f32.mrf.mxu0
    %v1089 = vadd.f32 %v982, %v1088
    %1090 = vdwg.mxu0
    %1091 = vst [vmem:[#allocation3] sm:$0xff] %v1027
    %1092 = vst [vmem:[#allocation3 + $0x8] sm:$0xff] %v1068
    %1093 = vst [vmem:[#allocation3 + $0x10] sm:$0xff] %v1030
    %1094 = vst [vmem:[#allocation3 + $0x18] sm:$0xff] %v1071
    %1095 = vst [vmem:[#allocation3 + $0x20] sm:$0xff] %v1033
    %1096 = vst [vmem:[#allocation3 + $0x28] sm:$0xff] %v1074
    %1097 = vst [vmem:[#allocation3 + $0x30] sm:$0xff] %v1036
    %1098 = vst [vmem:[#allocation3 + $0x38] sm:$0xff] %v1077
    %1099 = vst [vmem:[#allocation3 + $0x40] sm:$0xff] %v1039
    %1100 = vst [vmem:[#allocation3 + $0x48] sm:$0xff] %v1080
    %1101 = vst [vmem:[#allocation3 + $0x50] sm:$0xff] %v1042
    %1102 = vst [vmem:[#allocation3 + $0x58] sm:$0xff] %v1083
    %1103 = vst [vmem:[#allocation3 + $0x60] sm:$0xff] %v1045
    %1104 = vst [vmem:[#allocation3 + $0x68] sm:$0xff] %v1086
    %1105 = vst [vmem:[#allocation3 + $0x70] sm:$0xff] %v1048
    %1106 = vst [vmem:[#allocation3 + $0x78] sm:$0xff] %v1089
    %v1107 = vld [vmem:[#allocation6] sm:$0xff]
    %v1108 = vld [vmem:[#allocation6 + $0x8] sm:$0xff]
    %v1109 = vld [vmem:[#allocation6 + $0x10] sm:$0xff]
    %v1110 = vld [vmem:[#allocation6 + $0x18] sm:$0xff]
    %v1111 = vld [vmem:[#allocation6 + $0x20] sm:$0xff]
    %v1112 = vld [vmem:[#allocation6 + $0x28] sm:$0xff]
    %v1113 = vld [vmem:[#allocation6 + $0x30] sm:$0xff]
    %v1114 = vld [vmem:[#allocation6 + $0x38] sm:$0xff]
    %v1115 = vld [vmem:[#allocation6 + $0x40] sm:$0xff]
    %v1116 = vld [vmem:[#allocation6 + $0x48] sm:$0xff]
    %v1117 = vld [vmem:[#allocation6 + $0x50] sm:$0xff]
    %v1118 = vld [vmem:[#allocation6 + $0x58] sm:$0xff]
    %v1119 = vld [vmem:[#allocation6 + $0x60] sm:$0xff]
    %v1120 = vld [vmem:[#allocation6 + $0x68] sm:$0xff]
    %v1121 = vld [vmem:[#allocation6 + $0x70] sm:$0xff]
    %v1122 = vld [vmem:[#allocation6 + $0x78] sm:$0xff]
    %v1123 = vld [vmem:[#allocation3] sm:$0xff]
    %v1124 = vld [vmem:[#allocation3 + $0x8] sm:$0xff]
    %v1125 = vld [vmem:[#allocation3 + $0x70] sm:$0xff]
    %v1126 = vld [vmem:[#allocation3 + $0x78] sm:$0xff]
    %v1127 = vsel %vm163, %v1123, %v1125
    %v1128 = vsel %vm164, %v1124, %v1126
    %1129 = vmatpush.msra.mxu0 0.0
    %1130 = vmatpush.msra.mxu0 0.0
    %1131 = vmatpush.msra.mxu0 0.0
    %1132 = vmatpush.msra.mxu0 0.0
    %1133 = vmatpush.msra.mxu0 0.0
    %1134 = vmatpush.msra.mxu0 0.0
    %1135 = vmatpush.msra.mxu0 0.0
    %1136 = vmatpush.msra.mxu0 0.0
    %1137 = vmatpush.msra.mxu0 %v1121
    %1138 = vmatpush.msra.mxu0 %v1119
    %1139 = vmatpush.msra.mxu0 %v1117
    %1140 = vmatpush.msra.mxu0 %v1115
    %1141 = vmatpush.msra.mxu0 %v1113
    %1142 = vmatpush.msra.mxu0 %v1111
    %1143 = vmatpush.msra.mxu0 %v1109
    %1144 = vmatpush.msra.mxu0 %v1107
    %1145 = vmatmul.f32.gmra.mxu0 %v336
    %v1146 = vpop.f32.mrf.mxu0
    %v1147 = vadd.f32 0.0, %v1146
    %1148 = vdwg.mxu0
    %1149 = vmatpush.msra.mxu0 0.0
    %1150 = vmatpush.msra.mxu0 0.0
    %1151 = vmatpush.msra.mxu0 0.0
    %1152 = vmatpush.msra.mxu0 0.0
    %1153 = vmatpush.msra.mxu0 0.0
    %1154 = vmatpush.msra.mxu0 0.0
    %1155 = vmatpush.msra.mxu0 0.0
    %1156 = vmatpush.msra.mxu0 0.0
    %1157 = vmatpush.msra.mxu0 %v1122
    %1158 = vmatpush.msra.mxu0 %v1120
    %1159 = vmatpush.msra.mxu0 %v1118
    %1160 = vmatpush.msra.mxu0 %v1116
    %1161 = vmatpush.msra.mxu0 %v1114
    %1162 = vmatpush.msra.mxu0 %v1112
    %1163 = vmatpush.msra.mxu0 %v1110
    %1164 = vmatpush.msra.mxu0 %v1108
    %1165 = vmatmul.f32.gmra.mxu0 %v336
    %v1166 = vpop.f32.mrf.mxu0
    %v1167 = vadd.f32 0.0, %v1166
    %1168 = vdwg.mxu0
    %v1169 = vadd.f32 %v1127, %v1147
    %v1170 = vadd.f32 %v1128, %v1167
    %v1171 = vtanh.pop %v1169
    %v1172 = vtanh.pop %v1170
    %v1173 = vmul.f32 %v1171, 0.5
    %v1174 = vmul.f32 %v1172, 0.5
    %v1175 = vadd.f32 %v1173, 0.5
    %v1176 = vadd.f32 %v1174, 0.5
    %v1177 = vsel %vm137, %v1175, %v1171
    %v1178 = vsel %vm138, %v1176, %v1172
    %v1179 = vmul.f32 %v1177, 0.0
    %1181 = vrot.lane.b32.xlu0 %v1178, 64
    %v1182 = vpop.permute.xlu0 %1181
    %v1184 = vmul.f32 %v1177, %v1182
    %1186 = vrot.lane.b32.xlu0 %v1184, 64
    %v1187 = vpop.permute.xlu0 %1186
    %v1189 = vadd.f32 %v1179, %v1187
    %v1190 = vtanh.pop %v1189
    %1192 = vrot.lane.b32.xlu0 %v1190, 64
    %v1193 = vpop.permute.xlu0 %1192
    %v1195 = vmul.f32 %v1178, %v1193
    %v1196 = vld [vmem:[#allocation3 + $0x10] sm:$0xff]
    %v1197 = vld [vmem:[#allocation3 + $0x18] sm:$0xff]
    %v1198 = vld [vmem:[#allocation3 + $0x60] sm:$0xff]
    %v1199 = vld [vmem:[#allocation3 + $0x68] sm:$0xff]
    %v1200 = vsel %vm163, %v1196, %v1198
    %v1201 = vsel %vm164, %v1197, %v1199
    %v1203 = vsel %vm334, %v1195, 0
    %1205 = vmatpush.msra.mxu0 0.0
    %1206 = vmatpush.msra.mxu0 0.0
    %1207 = vmatpush.msra.mxu0 0.0
    %1208 = vmatpush.msra.mxu0 0.0
    %1209 = vmatpush.msra.mxu0 0.0
    %1210 = vmatpush.msra.mxu0 0.0
    %1211 = vmatpush.msra.mxu0 0.0
    %1212 = vmatpush.msra.mxu0 0.0
    %1213 = vmatpush.msra.mxu0 %v1121
    %1214 = vmatpush.msra.mxu0 %v1119
    %1215 = vmatpush.msra.mxu0 %v1117
    %1216 = vmatpush.msra.mxu0 %v1115
    %1217 = vmatpush.msra.mxu0 %v1113
    %1218 = vmatpush.msra.mxu0 %v1111
    %1219 = vmatpush.msra.mxu0 %v1109
    %1220 = vmatpush.msra.mxu0 %v1107
    %1221 = vmatmul.f32.gmra.mxu0 %v1203
    %v1222 = vpop.f32.mrf.mxu0
    %v1223 = vadd.f32 0.0, %v1222
    %1224 = vdwg.mxu0
    %1225 = vmatpush.msra.mxu0 0.0
    %1226 = vmatpush.msra.mxu0 0.0
    %1227 = vmatpush.msra.mxu0 0.0
    %1228 = vmatpush.msra.mxu0 0.0
    %1229 = vmatpush.msra.mxu0 0.0
    %1230 = vmatpush.msra.mxu0 0.0
    %1231 = vmatpush.msra.mxu0 0.0
    %1232 = vmatpush.msra.mxu0 0.0
    %1233 = vmatpush.msra.mxu0 %v1122
    %1234 = vmatpush.msra.mxu0 %v1120
    %1235 = vmatpush.msra.mxu0 %v1118
    %1236 = vmatpush.msra.mxu0 %v1116
    %1237 = vmatpush.msra.mxu0 %v1114
    %1238 = vmatpush.msra.mxu0 %v1112
    %1239 = vmatpush.msra.mxu0 %v1110
    %1240 = vmatpush.msra.mxu0 %v1108
    %1241 = vmatmul.f32.gmra.mxu0 %v1203
    %v1242 = vpop.f32.mrf.mxu0
    %v1243 = vadd.f32 0.0, %v1242
    %1244 = vdwg.mxu0
    %v1245 = vadd.f32 %v1200, %v1223
    %v1246 = vadd.f32 %v1201, %v1243
    %v1247 = vtanh.pop %v1245
    %v1248 = vtanh.pop %v1246
    %v1249 = vmul.f32 %v1247, 0.5
    %v1250 = vmul.f32 %v1248, 0.5
    %v1251 = vadd.f32 %v1249, 0.5
    %v1252 = vadd.f32 %v1250, 0.5
    %v1253 = vsel %vm137, %v1251, %v1247
    %v1254 = vsel %vm138, %v1252, %v1248
    %v1255 = vmul.f32 %v1253, %v1189
    %1257 = vrot.lane.b32.xlu0 %v1254, 64
    %v1258 = vpop.permute.xlu0 %1257
    %v1260 = vmul.f32 %v1253, %v1258
    %1262 = vrot.lane.b32.xlu0 %v1260, 64
    %v1263 = vpop.permute.xlu0 %1262
    %v1265 = vadd.f32 %v1255, %v1263
    %v1266 = vtanh.pop %v1265
    %1268 = vrot.lane.b32.xlu0 %v1266, 64
    %v1269 = vpop.permute.xlu0 %1268
    %v1271 = vmul.f32 %v1254, %v1269
    %v1272 = vld [vmem:[#allocation3 + $0x20] sm:$0xff]
    %v1273 = vld [vmem:[#allocation3 + $0x28] sm:$0xff]
    %v1274 = vld [vmem:[#allocation3 + $0x50] sm:$0xff]
    %v1275 = vld [vmem:[#allocation3 + $0x58] sm:$0xff]
    %v1276 = vsel %vm163, %v1272, %v1274
    %v1277 = vsel %vm164, %v1273, %v1275
    %v1279 = vsel %vm334, %v1271, 0
    %1281 = vmatpush.msra.mxu0 0.0
    %1282 = vmatpush.msra.mxu0 0.0
    %1283 = vmatpush.msra.mxu0 0.0
    %1284 = vmatpush.msra.mxu0 0.0
    %1285 = vmatpush.msra.mxu0 0.0
    %1286 = vmatpush.msra.mxu0 0.0
    %1287 = vmatpush.msra.mxu0 0.0
    %1288 = vmatpush.msra.mxu0 0.0
    %1289 = vmatpush.msra.mxu0 %v1121
    %1290 = vmatpush.msra.mxu0 %v1119
    %1291 = vmatpush.msra.mxu0 %v1117
    %1292 = vmatpush.msra.mxu0 %v1115
    %1293 = vmatpush.msra.mxu0 %v1113
    %1294 = vmatpush.msra.mxu0 %v1111
    %1295 = vmatpush.msra.mxu0 %v1109
    %1296 = vmatpush.msra.mxu0 %v1107
    %1297 = vmatmul.f32.gmra.mxu0 %v1279
    %v1298 = vpop.f32.mrf.mxu0
    %v1299 = vadd.f32 0.0, %v1298
    %1300 = vdwg.mxu0
    %1301 = vmatpush.msra.mxu0 0.0
    %1302 = vmatpush.msra.mxu0 0.0
    %1303 = vmatpush.msra.mxu0 0.0
    %1304 = vmatpush.msra.mxu0 0.0
    %1305 = vmatpush.msra.mxu0 0.0
    %1306 = vmatpush.msra.mxu0 0.0
    %1307 = vmatpush.msra.mxu0 0.0
    %1308 = vmatpush.msra.mxu0 0.0
    %1309 = vmatpush.msra.mxu0 %v1122
    %1310 = vmatpush.msra.mxu0 %v1120
    %1311 = vmatpush.msra.mxu0 %v1118
    %1312 = vmatpush.msra.mxu0 %v1116
    %1313 = vmatpush.msra.mxu0 %v1114
    %1314 = vmatpush.msra.mxu0 %v1112
    %1315 = vmatpush.msra.mxu0 %v1110
    %1316 = vmatpush.msra.mxu0 %v1108
    %1317 = vmatmul.f32.gmra.mxu0 %v1279
    %v1318 = vpop.f32.mrf.mxu0
    %v1319 = vadd.f32 0.0, %v1318
    %1320 = vdwg.mxu0
    %v1321 = vadd.f32 %v1276, %v1299
    %v1322 = vadd.f32 %v1277, %v1319
    %v1323 = vtanh.pop %v1321
    %v1324 = vtanh.pop %v1322
    %v1325 = vmul.f32 %v1323, 0.5
    %v1326 = vmul.f32 %v1324, 0.5
    %v1327 = vadd.f32 %v1325, 0.5
    %v1328 = vadd.f32 %v1326, 0.5
    %v1329 = vsel %vm137, %v1327, %v1323
    %v1330 = vsel %vm138, %v1328, %v1324
    %v1331 = vmul.f32 %v1329, %v1265
    %1333 = vrot.lane.b32.xlu0 %v1330, 64
    %v1334 = vpop.permute.xlu0 %1333
    %v1336 = vmul.f32 %v1329, %v1334
    %1338 = vrot.lane.b32.xlu0 %v1336, 64
    %v1339 = vpop.permute.xlu0 %1338
    %v1341 = vadd.f32 %v1331, %v1339
    %v1342 = vtanh.pop %v1341
    %1344 = vrot.lane.b32.xlu0 %v1342, 64
    %v1345 = vpop.permute.xlu0 %1344
    %v1347 = vmul.f32 %v1330, %v1345
    %v1348 = vld [vmem:[#allocation3 + $0x30] sm:$0xff]
    %v1349 = vld [vmem:[#allocation3 + $0x38] sm:$0xff]
    %v1350 = vld [vmem:[#allocation3 + $0x40] sm:$0xff]
    %v1351 = vld [vmem:[#allocation3 + $0x48] sm:$0xff]
    %v1352 = vsel %vm163, %v1348, %v1350
    %v1353 = vsel %vm164, %v1349, %v1351
    %v1355 = vsel %vm334, %v1347, 0
    %1357 = vmatpush.msra.mxu0 0.0
    %1358 = vmatpush.msra.mxu0 0.0
    %1359 = vmatpush.msra.mxu0 0.0
    %1360 = vmatpush.msra.mxu0 0.0
    %1361 = vmatpush.msra.mxu0 0.0
    %1362 = vmatpush.msra.mxu0 0.0
    %1363 = vmatpush.msra.mxu0 0.0
    %1364 = vmatpush.msra.mxu0 0.0
    %1365 = vmatpush.msra.mxu0 %v1121
    %1366 = vmatpush.msra.mxu0 %v1119
    %1367 = vmatpush.msra.mxu0 %v1117
    %1368 = vmatpush.msra.mxu0 %v1115
    %1369 = vmatpush.msra.mxu0 %v1113
    %1370 = vmatpush.msra.mxu0 %v1111
    %1371 = vmatpush.msra.mxu0 %v1109
    %1372 = vmatpush.msra.mxu0 %v1107
    %1373 = vmatmul.f32.gmra.mxu0 %v1355
    %v1374 = vpop.f32.mrf.mxu0
    %v1375 = vadd.f32 0.0, %v1374
    %1376 = vdwg.mxu0
    %1377 = vmatpush.msra.mxu0 0.0
    %1378 = vmatpush.msra.mxu0 0.0
    %1379 = vmatpush.msra.mxu0 0.0
    %1380 = vmatpush.msra.mxu0 0.0
    %1381 = vmatpush.msra.mxu0 0.0
    %1382 = vmatpush.msra.mxu0 0.0
    %1383 = vmatpush.msra.mxu0 0.0
    %1384 = vmatpush.msra.mxu0 0.0
    %1385 = vmatpush.msra.mxu0 %v1122
    %1386 = vmatpush.msra.mxu0 %v1120
    %1387 = vmatpush.msra.mxu0 %v1118
    %1388 = vmatpush.msra.mxu0 %v1116
    %1389 = vmatpush.msra.mxu0 %v1114
    %1390 = vmatpush.msra.mxu0 %v1112
    %1391 = vmatpush.msra.mxu0 %v1110
    %1392 = vmatpush.msra.mxu0 %v1108
    %1393 = vmatmul.f32.gmra.mxu0 %v1355
    %v1394 = vpop.f32.mrf.mxu0
    %v1395 = vadd.f32 0.0, %v1394
    %1396 = vdwg.mxu0
    %v1397 = vadd.f32 %v1352, %v1375
    %v1398 = vadd.f32 %v1353, %v1395
    %v1399 = vtanh.pop %v1397
    %v1400 = vtanh.pop %v1398
    %v1401 = vmul.f32 %v1399, 0.5
    %v1402 = vmul.f32 %v1400, 0.5
    %v1403 = vadd.f32 %v1401, 0.5
    %v1404 = vadd.f32 %v1402, 0.5
    %v1405 = vsel %vm137, %v1403, %v1399
    %v1406 = vsel %vm138, %v1404, %v1400
    %v1407 = vmul.f32 %v1405, %v1341
    %1409 = vrot.lane.b32.xlu0 %v1406, 64
    %v1410 = vpop.permute.xlu0 %1409
    %v1412 = vmul.f32 %v1405, %v1410
    %1414 = vrot.lane.b32.xlu0 %v1412, 64
    %v1415 = vpop.permute.xlu0 %1414
    %v1417 = vadd.f32 %v1407, %v1415
    %v1418 = vtanh.pop %v1417
    %1420 = vrot.lane.b32.xlu0 %v1418, 64
    %v1421 = vpop.permute.xlu0 %1420
    %v1423 = vmul.f32 %v1406, %v1421
    %v1424 = vsel %vm163, %v1350, %v1348
    %v1425 = vsel %vm164, %v1351, %v1349
    %v1427 = vsel %vm334, %v1423, 0
    %1429 = vmatpush.msra.mxu0 0.0
    %1430 = vmatpush.msra.mxu0 0.0
    %1431 = vmatpush.msra.mxu0 0.0
    %1432 = vmatpush.msra.mxu0 0.0
    %1433 = vmatpush.msra.mxu0 0.0
    %1434 = vmatpush.msra.mxu0 0.0
    %1435 = vmatpush.msra.mxu0 0.0
    %1436 = vmatpush.msra.mxu0 0.0
    %1437 = vmatpush.msra.mxu0 %v1121
    %1438 = vmatpush.msra.mxu0 %v1119
    %1439 = vmatpush.msra.mxu0 %v1117
    %1440 = vmatpush.msra.mxu0 %v1115
    %1441 = vmatpush.msra.mxu0 %v1113
    %1442 = vmatpush.msra.mxu0 %v1111
    %1443 = vmatpush.msra.mxu0 %v1109
    %1444 = vmatpush.msra.mxu0 %v1107
    %1445 = vmatmul.f32.gmra.mxu0 %v1427
    %v1446 = vpop.f32.mrf.mxu0
    %v1447 = vadd.f32 0.0, %v1446
    %1448 = vdwg.mxu0
    %1449 = vmatpush.msra.mxu0 0.0
    %1450 = vmatpush.msra.mxu0 0.0
    %1451 = vmatpush.msra.mxu0 0.0
    %1452 = vmatpush.msra.mxu0 0.0
    %1453 = vmatpush.msra.mxu0 0.0
    %1454 = vmatpush.msra.mxu0 0.0
    %1455 = vmatpush.msra.mxu0 0.0
    %1456 = vmatpush.msra.mxu0 0.0
    %1457 = vmatpush.msra.mxu0 %v1122
    %1458 = vmatpush.msra.mxu0 %v1120
    %1459 = vmatpush.msra.mxu0 %v1118
    %1460 = vmatpush.msra.mxu0 %v1116
    %1461 = vmatpush.msra.mxu0 %v1114
    %1462 = vmatpush.msra.mxu0 %v1112
    %1463 = vmatpush.msra.mxu0 %v1110
    %1464 = vmatpush.msra.mxu0 %v1108
    %1465 = vmatmul.f32.gmra.mxu0 %v1427
    %v1466 = vpop.f32.mrf.mxu0
    %v1467 = vadd.f32 0.0, %v1466
    %1468 = vdwg.mxu0
    %v1469 = vadd.f32 %v1424, %v1447
    %v1470 = vadd.f32 %v1425, %v1467
    %v1471 = vtanh.pop %v1469
    %v1472 = vtanh.pop %v1470
    %v1473 = vmul.f32 %v1471, 0.5
    %v1474 = vmul.f32 %v1472, 0.5
    %v1475 = vadd.f32 %v1473, 0.5
    %v1476 = vadd.f32 %v1474, 0.5
    %v1477 = vsel %vm137, %v1475, %v1471
    %v1478 = vsel %vm138, %v1476, %v1472
    %v1479 = vmul.f32 %v1477, %v1417
    %1481 = vrot.lane.b32.xlu0 %v1478, 64
    %v1482 = vpop.permute.xlu0 %1481
    %v1484 = vmul.f32 %v1477, %v1482
    %1486 = vrot.lane.b32.xlu0 %v1484, 64
    %v1487 = vpop.permute.xlu0 %1486
    %v1489 = vadd.f32 %v1479, %v1487
    %v1490 = vtanh.pop %v1489
    %1492 = vrot.lane.b32.xlu0 %v1490, 64
    %v1493 = vpop.permute.xlu0 %1492
    %v1495 = vmul.f32 %v1478, %v1493
    %v1496 = vsel %vm163, %v1274, %v1272
    %v1497 = vsel %vm164, %v1275, %v1273
    %v1499 = vsel %vm334, %v1495, 0
    %1501 = vmatpush.msra.mxu0 0.0
    %1502 = vmatpush.msra.mxu0 0.0
    %1503 = vmatpush.msra.mxu0 0.0
    %1504 = vmatpush.msra.mxu0 0.0
    %1505 = vmatpush.msra.mxu0 0.0
    %1506 = vmatpush.msra.mxu0 0.0
    %1507 = vmatpush.msra.mxu0 0.0
    %1508 = vmatpush.msra.mxu0 0.0
    %1509 = vmatpush.msra.mxu0 %v1121
    %1510 = vmatpush.msra.mxu0 %v1119
    %1511 = vmatpush.msra.mxu0 %v1117
    %1512 = vmatpush.msra.mxu0 %v1115
    %1513 = vmatpush.msra.mxu0 %v1113
    %1514 = vmatpush.msra.mxu0 %v1111
    %1515 = vmatpush.msra.mxu0 %v1109
    %1516 = vmatpush.msra.mxu0 %v1107
    %1517 = vmatmul.f32.gmra.mxu0 %v1499
    %v1518 = vpop.f32.mrf.mxu0
    %v1519 = vadd.f32 0.0, %v1518
    %1520 = vdwg.mxu0
    %1521 = vmatpush.msra.mxu0 0.0
    %1522 = vmatpush.msra.mxu0 0.0
    %1523 = vmatpush.msra.mxu0 0.0
    %1524 = vmatpush.msra.mxu0 0.0
    %1525 = vmatpush.msra.mxu0 0.0
    %1526 = vmatpush.msra.mxu0 0.0
    %1527 = vmatpush.msra.mxu0 0.0
    %1528 = vmatpush.msra.mxu0 0.0
    %1529 = vmatpush.msra.mxu0 %v1122
    %1530 = vmatpush.msra.mxu0 %v1120
    %1531 = vmatpush.msra.mxu0 %v1118
    %1532 = vmatpush.msra.mxu0 %v1116
    %1533 = vmatpush.msra.mxu0 %v1114
    %1534 = vmatpush.msra.mxu0 %v1112
    %1535 = vmatpush.msra.mxu0 %v1110
    %1536 = vmatpush.msra.mxu0 %v1108
    %1537 = vmatmul.f32.gmra.mxu0 %v1499
    %v1538 = vpop.f32.mrf.mxu0
    %v1539 = vadd.f32 0.0, %v1538
    %1540 = vdwg.mxu0
    %v1541 = vadd.f32 %v1496, %v1519
    %v1542 = vadd.f32 %v1497, %v1539
    %v1543 = vtanh.pop %v1541
    %v1544 = vtanh.pop %v1542
    %v1545 = vmul.f32 %v1543, 0.5
    %v1546 = vmul.f32 %v1544, 0.5
    %v1547 = vadd.f32 %v1545, 0.5
    %v1548 = vadd.f32 %v1546, 0.5
    %v1549 = vsel %vm137, %v1547, %v1543
    %v1550 = vsel %vm138, %v1548, %v1544
    %v1551 = vmul.f32 %v1549, %v1489
    %1553 = vrot.lane.b32.xlu0 %v1550, 64
    %v1554 = vpop.permute.xlu0 %1553
    %v1556 = vmul.f32 %v1549, %v1554
    %1558 = vrot.lane.b32.xlu0 %v1556, 64
    %v1559 = vpop.permute.xlu0 %1558
    %v1561 = vadd.f32 %v1551, %v1559
    %v1562 = vtanh.pop %v1561
    %1564 = vrot.lane.b32.xlu0 %v1562, 64
    %v1565 = vpop.permute.xlu0 %1564
    %v1567 = vmul.f32 %v1550, %v1565
    %v1568 = vsel %vm163, %v1198, %v1196
    %v1569 = vsel %vm164, %v1199, %v1197
    %v1571 = vsel %vm334, %v1567, 0
    %1573 = vmatpush.msra.mxu0 0.0
    %1574 = vmatpush.msra.mxu0 0.0
    %1575 = vmatpush.msra.mxu0 0.0
    %1576 = vmatpush.msra.mxu0 0.0
    %1577 = vmatpush.msra.mxu0 0.0
    %1578 = vmatpush.msra.mxu0 0.0
    %1579 = vmatpush.msra.mxu0 0.0
    %1580 = vmatpush.msra.mxu0 0.0
    %1581 = vmatpush.msra.mxu0 %v1121
    %1582 = vmatpush.msra.mxu0 %v1119
    %1583 = vmatpush.msra.mxu0 %v1117
    %1584 = vmatpush.msra.mxu0 %v1115
    %1585 = vmatpush.msra.mxu0 %v1113
    %1586 = vmatpush.msra.mxu0 %v1111
    %1587 = vmatpush.msra.mxu0 %v1109
    %1588 = vmatpush.msra.mxu0 %v1107
    %1589 = vmatmul.f32.gmra.mxu0 %v1571
    %v1590 = vpop.f32.mrf.mxu0
    %v1591 = vadd.f32 0.0, %v1590
    %1592 = vdwg.mxu0
    %1593 = vmatpush.msra.mxu0 0.0
    %1594 = vmatpush.msra.mxu0 0.0
    %1595 = vmatpush.msra.mxu0 0.0
    %1596 = vmatpush.msra.mxu0 0.0
    %1597 = vmatpush.msra.mxu0 0.0
    %1598 = vmatpush.msra.mxu0 0.0
    %1599 = vmatpush.msra.mxu0 0.0
    %1600 = vmatpush.msra.mxu0 0.0
    %1601 = vmatpush.msra.mxu0 %v1122
    %1602 = vmatpush.msra.mxu0 %v1120
    %1603 = vmatpush.msra.mxu0 %v1118
    %1604 = vmatpush.msra.mxu0 %v1116
    %1605 = vmatpush.msra.mxu0 %v1114
    %1606 = vmatpush.msra.mxu0 %v1112
    %1607 = vmatpush.msra.mxu0 %v1110
    %1608 = vmatpush.msra.mxu0 %v1108
    %1609 = vmatmul.f32.gmra.mxu0 %v1571
    %v1610 = vpop.f32.mrf.mxu0
    %v1611 = vadd.f32 0.0, %v1610
    %1612 = vdwg.mxu0
    %v1613 = vadd.f32 %v1568, %v1591
    %v1614 = vadd.f32 %v1569, %v1611
    %v1615 = vtanh.pop %v1613
    %v1616 = vtanh.pop %v1614
    %v1617 = vmul.f32 %v1615, 0.5
    %v1618 = vmul.f32 %v1616, 0.5
    %v1619 = vadd.f32 %v1617, 0.5
    %v1620 = vadd.f32 %v1618, 0.5
    %v1621 = vsel %vm137, %v1619, %v1615
    %v1622 = vsel %vm138, %v1620, %v1616
    %v1623 = vmul.f32 %v1621, %v1561
    %1625 = vrot.lane.b32.xlu0 %v1622, 64
    %v1626 = vpop.permute.xlu0 %1625
    %v1628 = vmul.f32 %v1621, %v1626
    %1630 = vrot.lane.b32.xlu0 %v1628, 64
    %v1631 = vpop.permute.xlu0 %1630
    %v1633 = vadd.f32 %v1623, %v1631
    %v1634 = vtanh.pop %v1633
    %1636 = vrot.lane.b32.xlu0 %v1634, 64
    %v1637 = vpop.permute.xlu0 %1636
    %v1639 = vmul.f32 %v1622, %v1637
    %v1640 = vsel %vm163, %v1125, %v1123
    %v1641 = vsel %vm164, %v1126, %v1124
    %v1643 = vsel %vm334, %v1639, 0
    %1645 = vmatpush.msra.mxu0 0.0
    %1646 = vmatpush.msra.mxu0 0.0
    %1647 = vmatpush.msra.mxu0 0.0
    %1648 = vmatpush.msra.mxu0 0.0
    %1649 = vmatpush.msra.mxu0 0.0
    %1650 = vmatpush.msra.mxu0 0.0
    %1651 = vmatpush.msra.mxu0 0.0
    %1652 = vmatpush.msra.mxu0 0.0
    %1653 = vmatpush.msra.mxu0 %v1121
    %1654 = vmatpush.msra.mxu0 %v1119
    %1655 = vmatpush.msra.mxu0 %v1117
    %1656 = vmatpush.msra.mxu0 %v1115
    %1657 = vmatpush.msra.mxu0 %v1113
    %1658 = vmatpush.msra.mxu0 %v1111
    %1659 = vmatpush.msra.mxu0 %v1109
    %1660 = vmatpush.msra.mxu0 %v1107
    %1661 = vmatmul.f32.gmra.mxu0 %v1643
    %v1662 = vpop.f32.mrf.mxu0
    %v1663 = vadd.f32 0.0, %v1662
    %1664 = vdwg.mxu0
    %1665 = vmatpush.msra.mxu0 0.0
    %1666 = vmatpush.msra.mxu0 0.0
    %1667 = vmatpush.msra.mxu0 0.0
    %1668 = vmatpush.msra.mxu0 0.0
    %1669 = vmatpush.msra.mxu0 0.0
    %1670 = vmatpush.msra.mxu0 0.0
    %1671 = vmatpush.msra.mxu0 0.0
    %1672 = vmatpush.msra.mxu0 0.0
    %1673 = vmatpush.msra.mxu0 %v1122
    %1674 = vmatpush.msra.mxu0 %v1120
    %1675 = vmatpush.msra.mxu0 %v1118
    %1676 = vmatpush.msra.mxu0 %v1116
    %1677 = vmatpush.msra.mxu0 %v1114
    %1678 = vmatpush.msra.mxu0 %v1112
    %1679 = vmatpush.msra.mxu0 %v1110
    %1680 = vmatpush.msra.mxu0 %v1108
    %1681 = vmatmul.f32.gmra.mxu0 %v1643
    %v1682 = vpop.f32.mrf.mxu0
    %v1683 = vadd.f32 0.0, %v1682
    %1684 = vdwg.mxu0
    %v1685 = vadd.f32 %v1640, %v1663
    %v1686 = vadd.f32 %v1641, %v1683
    %v1687 = vtanh.pop %v1685
    %v1688 = vtanh.pop %v1686
    %v1689 = vmul.f32 %v1687, 0.5
    %v1690 = vmul.f32 %v1688, 0.5
    %v1691 = vadd.f32 %v1689, 0.5
    %v1692 = vadd.f32 %v1690, 0.5
    %v1693 = vsel %vm137, %v1691, %v1687
    %v1694 = vsel %vm138, %v1692, %v1688
    %v1695 = vmul.f32 %v1693, %v1633
    %1697 = vrot.lane.b32.xlu0 %v1694, 64
    %v1698 = vpop.permute.xlu0 %1697
    %v1700 = vmul.f32 %v1693, %v1698
    %1702 = vrot.lane.b32.xlu0 %v1700, 64
    %v1703 = vpop.permute.xlu0 %1702
    %v1705 = vadd.f32 %v1695, %v1703
    %v1706 = vtanh.pop %v1705
    %1708 = vrot.lane.b32.xlu0 %v1706, 64
    %v1709 = vpop.permute.xlu0 %1708
    %v1711 = vmul.f32 %v1694, %v1709
    %v1712 = vld [vmem:[#allocation8] sm:$0xff]
    %v1713 = vld [vmem:[#allocation8 + $0x8] sm:$0xff]
    %v1714 = vld [vmem:[#allocation8 + $0x10] sm:$0xff]
    %v1715 = vld [vmem:[#allocation8 + $0x18] sm:$0xff]
    %v1716 = vld [vmem:[#allocation8 + $0x20] sm:$0xff]
    %v1717 = vld [vmem:[#allocation8 + $0x28] sm:$0xff]
    %v1718 = vld [vmem:[#allocation8 + $0x30] sm:$0xff]
    %v1719 = vld [vmem:[#allocation8 + $0x38] sm:$0xff]
    %v1720 = vld [vmem:[%s1] sm:$0xff]
    %v1721 = vld [vmem:[%s9] sm:$0xff]
    %vm1722 = vcmask 64512
    %v1724 = vsel %vm1722, %v1720, 0
    %1726 = vmatpush.msra.mxu0 0.0
    %1727 = vmatpush.msra.mxu0 0.0
    %1728 = vmatpush.msra.mxu0 0.0
    %1729 = vmatpush.msra.mxu0 0.0
    %1730 = vmatpush.msra.mxu0 0.0
    %1731 = vmatpush.msra.mxu0 0.0
    %1732 = vmatpush.msra.mxu0 0.0
    %1733 = vmatpush.msra.mxu0 0.0
    %1734 = vmatpush.msra.mxu0 0.0
    %1735 = vmatpush.msra.mxu0 0.0
    %1736 = vmatpush.msra.mxu0 0.0
    %1737 = vmatpush.msra.mxu0 0.0
    %1738 = vmatpush.msra.mxu0 0.0
    %1739 = vmatpush.msra.mxu0 0.0
    %1740 = vmatpush.msra.mxu0 0.0
    %1741 = vmatpush.msra.mxu0 %v1721
    %1742 = vmatmul.f32.gmra.mxu0 %v1724
    %v1743 = vpop.f32.mrf.mxu0
    %v1744 = vadd.f32 0.0, %v1743
    %1745 = vdwg.mxu0
    %v1747 = vsel %vm334, %v1711, 0
    %1749 = vmatpush.msra.mxu0 0.0
    %1750 = vmatpush.msra.mxu0 0.0
    %1751 = vmatpush.msra.mxu0 0.0
    %1752 = vmatpush.msra.mxu0 0.0
    %1753 = vmatpush.msra.mxu0 0.0
    %1754 = vmatpush.msra.mxu0 0.0
    %1755 = vmatpush.msra.mxu0 0.0
    %1756 = vmatpush.msra.mxu0 0.0
    %1757 = vmatpush.msra.mxu0 %v1719
    %1758 = vmatpush.msra.mxu0 %v1718
    %1759 = vmatpush.msra.mxu0 %v1717
    %1760 = vmatpush.msra.mxu0 %v1716
    %1761 = vmatpush.msra.mxu0 %v1715
    %1762 = vmatpush.msra.mxu0 %v1714
    %1763 = vmatpush.msra.mxu0 %v1713
    %1764 = vmatpush.msra.mxu0 %v1712
    %1765 = vmatmul.f32.gmra.mxu0 %v1747
    %v1766 = vpop.f32.mrf.mxu0
    %v1767 = vadd.f32 %v1744, %v1766
    %1768 = vdwg.mxu0
    %v1769 = vld [vmem:[#allocation9] sm:$0x1]
    %v1771 = vperm.slane %v1769, 0
    %v1773 = vadd.f32 %v1767, %v1771
    %v1774 = vmax.f32 %v1773, 0.0
    %v1775 = vld [vmem:[#allocation11] sm:$0xff]
    %v1776 = vld [vmem:[#allocation11 + $0x8] sm:$0xff]
    %v1777 = vld [vmem:[#allocation11 + $0x10] sm:$0xff]
    %v1778 = vld [vmem:[#allocation11 + $0x18] sm:$0xff]
    %v1779 = vld [vmem:[#allocation11 + $0x20] sm:$0xff]
    %v1780 = vld [vmem:[#allocation11 + $0x28] sm:$0xff]
    %v1781 = vld [vmem:[#allocation11 + $0x30] sm:$0xff]
    %v1782 = vld [vmem:[#allocation11 + $0x38] sm:$0xff]
    %v1783 = vld [vmem:[#allocation12] sm:$0x1]
    %v1785 = vperm.slane %v1783, 0
    %v1788 = vsel %vm334, %v1774, 0
    %1790 = vmatpush.msra.mxu0 0.0
    %1791 = vmatpush.msra.mxu0 0.0
    %1792 = vmatpush.msra.mxu0 0.0
    %1793 = vmatpush.msra.mxu0 0.0
    %1794 = vmatpush.msra.mxu0 0.0
    %1795 = vmatpush.msra.mxu0 0.0
    %1796 = vmatpush.msra.mxu0 0.0
    %1797 = vmatpush.msra.mxu0 0.0
    %1798 = vmatpush.msra.mxu0 %v1782
    %1799 = vmatpush.msra.mxu0 %v1781
    %1800 = vmatpush.msra.mxu0 %v1780
    %1801 = vmatpush.msra.mxu0 %v1779
    %1802 = vmatpush.msra.mxu0 %v1778
    %1803 = vmatpush.msra.mxu0 %v1777
    %1804 = vmatpush.msra.mxu0 %v1776
    %1805 = vmatpush.msra.mxu0 %v1775
    %1806 = vmatmul.f32.gmra.mxu0 %v1788
    %v1807 = vpop.f32.mrf.mxu0
    %v1808 = vadd.f32 %v1785, %v1807
    %1809 = vdwg.mxu0
    %1810 = vst [vmem:[%s13] sm:$0xff] %v1808
    // Predicated region
    $region78: #{generator_cgan_forward.1} parent=1 // pred_check
      _
    $region79: #{generator_cgan_forward.1} parent=1 // pred_check_branch
      %1812 = sbr.rel (0) target = $region81
    $region80: #{generator_cgan_forward.1} parent=1 // pred_region
      _
    $region81: #{generator_cgan_forward.1} parent=1 // pred_fallthru
      _
    // Predicated region
    $region82: #{generator_cgan_forward.1} parent=1 // pred_check
      _
    $region83: #{generator_cgan_forward.1} parent=1 // pred_check_branch
      %1814 = sbr.rel (0) target = $region85
    $region84: #{generator_cgan_forward.1} parent=1 // pred_region
      _
    $region85: #{generator_cgan_forward.1} parent=1 // pred_fallthru
      _
    %1815 = vsyncpa [#allocation5], 1
    %1816 = vsyncpa [#allocation7], 1
    %1817 = vsyncpa [#allocation10], 1
    %1818 = vsyncpa [#allocation13], 1

</llo_original>
